<compile_context>
chip_gen: v5e
topology: v5e:2x2
jax: 0.10.0
libtpu: 0.0.40
codegen_flags: <defaults>
</compile_context>

<pallas_src>
import functools

import numpy as np
import jax
import jax.numpy as jnp
from jax import lax
from jax.experimental import pallas as pl
from jax.experimental.pallas import tpu as pltpu


def _replication_pad_kernel(x_ref, o_ref, *, p, P, TB, C, H, W):
    Hp, Wp = H + 2 * p, W + 2 * p
    i = pl.program_id(0)
    x = x_ref[...]                                              # (TB, C, H, W)

    # ---- replicate padding, composed as a value (no partial stores) ----
    top = jnp.broadcast_to(x[:, :, 0:1, :], (TB, C, p, W))
    bot = jnp.broadcast_to(x[:, :, H - 1:H, :], (TB, C, p, W))
    xh = jnp.concatenate([top, x, bot], axis=2)                 # (TB, C, Hp, W)
    left = jnp.broadcast_to(xh[:, :, :, 0:1], (TB, C, Hp, p))
    right = jnp.broadcast_to(xh[:, :, :, W - 1:W], (TB, C, Hp, p))
    xp = jnp.concatenate([left, xh, right], axis=3)             # (TB, C, Hp, Wp)

    # ---- border-zero mask (depends on global batch index, rows, cols) ----
    bat = lax.broadcasted_iota(jnp.int32, (TB, 1, Hp, Wp), 0)
    row = lax.broadcasted_iota(jnp.int32, (TB, 1, Hp, Wp), 2)
    col = lax.broadcasted_iota(jnp.int32, (TB, 1, Hp, Wp), 3)
    n = i * TB + bat                      # global batch (patch) index
    k = n % (P * P)                       # position inside the P x P patch grid
    c = n % P                             # column inside the patch grid
    zmask = (((k < P) & (row < p))                       # top patches: rows [0,p)
             | ((k >= P * P - P) & (row == H + p))       # bottom patches: single row H+p
             | ((c == 0) & (col < p))                    # left patches: cols [0,p)
             | ((c == P - 1) & (col >= W + p)))          # right patches: cols [W+p,Wp)

    # single composed store; zmask broadcasts over the channel dim
    o_ref[...] = jnp.where(zmask, jnp.zeros_like(xp), xp).astype(o_ref.dtype)


def replication_pad2d(x, padding, num_patches, *, block_batch=None,
                      vmem_budget_bytes=8 * 1024 * 1024):
    b, C, H, W = x.shape
    p, P = int(padding), int(num_patches)
    Hp, Wp = H + 2 * p, W + 2 * p
    itemsize = jnp.dtype(x.dtype).itemsize

    def _padded_block_bytes(tb):
        # VMEM layout pads the last two dims to multiples of (8, 128).
        def tile(h, w):
            return tb * C * (-(-h // 8) * 8) * (-(-w // 128) * 128) * itemsize
        return tile(H, W) + tile(Hp, Wp)

    if block_batch is None:
        # largest divisor of b whose double-buffered in+out blocks fit the budget
        TB = 1
        for cand in range(1, b + 1):
            if b % cand == 0 and 2 * _padded_block_bytes(cand) <= vmem_budget_bytes:
                TB = cand
    else:
        TB = int(block_batch)
        assert b % TB == 0, "block_batch must divide the batch size"

    kernel = functools.partial(_replication_pad_kernel,
                               p=p, P=P, TB=TB, C=C, H=H, W=W)
    cost = pl.CostEstimate(
        flops=0,
        transcendentals=0,
        bytes_accessed=int(b * C * (H * W + Hp * Wp) * itemsize),
    )
    return pl.pallas_call(
        kernel,
        out_shape=jax.ShapeDtypeStruct((b, C, Hp, Wp), x.dtype),
        grid=(b // TB,),
        in_specs=[pl.BlockSpec((TB, C, H, W), lambda i: (i, 0, 0, 0))],
        out_specs=pl.BlockSpec((TB, C, Hp, Wp), lambda i: (i, 0, 0, 0)),
        compiler_params=pltpu.CompilerParams(
            dimension_semantics=("parallel",),
            vmem_limit_bytes=32 * 1024 * 1024,
        ),
        cost_estimate=cost,
    )(x)


def ref_forward(x, padding, num_patches):
    """Pure-JAX reference mirroring the torch ReplicationPad2d.forward exactly."""
    b, C, H, W = x.shape
    p, P = int(padding), int(num_patches)
    B = b // P ** 2
    Hp, Wp = H + 2 * p, W + 2 * p
    xp = jnp.pad(x, ((0, 0), (0, 0), (p, p), (p, p)), mode="edge")
    top = jnp.tile(jnp.arange(P), B) + jnp.repeat(jnp.arange(0, b, P ** 2), P)
    bot = jnp.tile(jnp.arange(P ** 2 - P, P ** 2), B) + jnp.repeat(jnp.arange(0, b, P ** 2), P)
    left = jnp.arange(0, b, P)
    right = jnp.arange(P - 1, b, P)
    xp = xp.at[top, :, :p, :].set(0.0)
    xp = xp.at[bot, :, Hp - p, :].set(0.0)      # single row H + p, as in torch
    xp = xp.at[left, :, :, :p].set(0.0)
    xp = xp.at[right, :, :, Wp - p:].set(0.0)
    return xp


if __name__ == "__main__":
    padding, num_patches = 1, 2
    B_imgs = 2
    b = B_imgs * num_patches ** 2          # batch of patch-crops: 8
    C, H, W = 4, 16, 16

    key = jax.random.PRNGKey(0)
    x = jax.random.normal(key, (b, C, H, W), dtype=jnp.float32)

    out = jax.block_until_ready(replication_pad2d(x, padding, num_patches))
    ref = jax.block_until_ready(ref_forward(x, padding, num_patches))

    np.testing.assert_allclose(np.asarray(out), np.asarray(ref), rtol=1e-6, atol=1e-6)
    assert out.shape == (b, C, H + 2 * padding, W + 2 * padding)
    print("KERNEL_OK")
</pallas_src>

<mosaic_0001>
module attributes {stable_mosaic.version = 11 : i64} {
  func.func @_replication_pad_kernel(%arg0: i32, %arg1: memref<8x4x16x16xf32, #tpu.memory_space<vmem>>, %arg2: memref<8x4x18x18xf32, #tpu.memory_space<vmem>>) attributes {dimension_semantics = [#tpu.dimension_semantics<parallel>], iteration_bounds = array<i64: 1>, scalar_prefetch = 0 : i64, scratch_operands = 0 : i64, tpu.core_type = #tpu.core_type<tc>, window_params = [{transform_indices = @transform_0, window_bounds = array<i64: 8, 4, 16, 16>}, {transform_indices = @transform_1, window_bounds = array<i64: 8, 4, 18, 18>}]} {
    %c0 = arith.constant 0 : index
    %c0_0 = arith.constant 0 : index
    %c0_1 = arith.constant 0 : index
    %c0_2 = arith.constant 0 : index
    %0 = vector.load %arg1[%c0, %c0_0, %c0_1, %c0_2] : memref<8x4x16x16xf32, #tpu.memory_space<vmem>>, vector<8x4x16x16xf32>
    %1 = vector.extract_strided_slice %0 {offsets = [0, 0, 0, 0], sizes = [8, 4, 1, 16], strides = [1, 1, 1, 1]} : vector<8x4x16x16xf32> to vector<8x4x1x16xf32>
    %2 = vector.extract_strided_slice %0 {offsets = [0, 0, 15, 0], sizes = [8, 4, 1, 16], strides = [1, 1, 1, 1]} : vector<8x4x16x16xf32> to vector<8x4x1x16xf32>
    %3 = tpu.concatenate %1, %0, %2 in 2 : vector<8x4x1x16xf32>, vector<8x4x16x16xf32>, vector<8x4x1x16xf32> -> vector<8x4x18x16xf32>
    %4 = vector.extract_strided_slice %3 {offsets = [0, 0, 0, 0], sizes = [8, 4, 18, 1], strides = [1, 1, 1, 1]} : vector<8x4x18x16xf32> to vector<8x4x18x1xf32>
    %5 = vector.extract_strided_slice %3 {offsets = [0, 0, 0, 15], sizes = [8, 4, 18, 1], strides = [1, 1, 1, 1]} : vector<8x4x18x16xf32> to vector<8x4x18x1xf32>
    %6 = tpu.concatenate %4, %3, %5 in 3 : vector<8x4x18x1xf32>, vector<8x4x18x16xf32>, vector<8x4x18x1xf32> -> vector<8x4x18x18xf32>
    %7 = tpu.iota {dimensions = array<i32: 0>} : vector<8x1x18x18xi32>
    %8 = tpu.iota {dimensions = array<i32: 2>} : vector<8x1x18x18xi32>
    %9 = tpu.iota {dimensions = array<i32: 3>} : vector<8x1x18x18xi32>
    %c8_i32 = arith.constant 8 : i32
    %10 = arith.muli %arg0, %c8_i32 : i32
    %11 = vector.broadcast %10 : i32 to vector<8x1x18x18xi32>
    %12 = arith.addi %11, %7 : vector<8x1x18x18xi32>
    %c4_i32 = arith.constant 4 : i32
    %c0_i32 = arith.constant 0 : i32
    %13 = arith.cmpi eq, %c4_i32, %c0_i32 : i32
    %c1_i32 = arith.constant 1 : i32
    %14 = arith.select %13, %c1_i32, %c4_i32 : i32
    %15 = vector.broadcast %14 : i32 to vector<8x1x18x18xi32>
    %16 = arith.remsi %12, %15 : vector<8x1x18x18xi32>
    %c0_i32_3 = arith.constant 0 : i32
    %17 = vector.broadcast %c0_i32_3 : i32 to vector<8x1x18x18xi32>
    %18 = arith.cmpi ne, %16, %17 : vector<8x1x18x18xi32>
    %c0_i32_4 = arith.constant 0 : i32
    %19 = vector.broadcast %c0_i32_4 : i32 to vector<8x1x18x18xi32>
    %20 = arith.cmpi slt, %16, %19 : vector<8x1x18x18xi32>
    %c0_i32_5 = arith.constant 0 : i32
    %21 = arith.cmpi slt, %14, %c0_i32_5 : i32
    %22 = vector.broadcast %21 : i1 to vector<8x1x18x18xi1>
    %23 = vector.broadcast %22 : vector<8x1x18x18xi1> to vector<8x1x18x18xi1>
    %24 = arith.xori %20, %23 : vector<8x1x18x18xi1>
    %25 = arith.andi %24, %18 : vector<8x1x18x18xi1>
    %26 = vector.broadcast %14 : i32 to vector<8x1x18x18xi32>
    %27 = arith.addi %16, %26 : vector<8x1x18x18xi32>
    %28 = arith.select %25, %27, %16 : vector<8x1x18x18xi1>, vector<8x1x18x18xi32>
    %c2_i32 = arith.constant 2 : i32
    %c0_i32_6 = arith.constant 0 : i32
    %29 = arith.cmpi eq, %c2_i32, %c0_i32_6 : i32
    %c1_i32_7 = arith.constant 1 : i32
    %30 = arith.select %29, %c1_i32_7, %c2_i32 : i32
    %31 = vector.broadcast %30 : i32 to vector<8x1x18x18xi32>
    %32 = arith.remsi %12, %31 : vector<8x1x18x18xi32>
    %c0_i32_8 = arith.constant 0 : i32
    %33 = vector.broadcast %c0_i32_8 : i32 to vector<8x1x18x18xi32>
    %34 = arith.cmpi ne, %32, %33 : vector<8x1x18x18xi32>
    %c0_i32_9 = arith.constant 0 : i32
    %35 = vector.broadcast %c0_i32_9 : i32 to vector<8x1x18x18xi32>
    %36 = arith.cmpi slt, %32, %35 : vector<8x1x18x18xi32>
    %c0_i32_10 = arith.constant 0 : i32
    %37 = arith.cmpi slt, %30, %c0_i32_10 : i32
    %38 = vector.broadcast %37 : i1 to vector<8x1x18x18xi1>
    %39 = vector.broadcast %38 : vector<8x1x18x18xi1> to vector<8x1x18x18xi1>
    %40 = arith.xori %36, %39 : vector<8x1x18x18xi1>
    %41 = arith.andi %40, %34 : vector<8x1x18x18xi1>
    %42 = vector.broadcast %30 : i32 to vector<8x1x18x18xi32>
    %43 = arith.addi %32, %42 : vector<8x1x18x18xi32>
    %44 = arith.select %41, %43, %32 : vector<8x1x18x18xi1>, vector<8x1x18x18xi32>
    %c2_i32_11 = arith.constant 2 : i32
    %45 = vector.broadcast %c2_i32_11 : i32 to vector<8x1x18x18xi32>
    %46 = arith.cmpi slt, %28, %45 : vector<8x1x18x18xi32>
    %c1_i32_12 = arith.constant 1 : i32
    %47 = vector.broadcast %c1_i32_12 : i32 to vector<8x1x18x18xi32>
    %48 = arith.cmpi slt, %8, %47 : vector<8x1x18x18xi32>
    %49 = arith.andi %46, %48 : vector<8x1x18x18xi1>
    %c2_i32_13 = arith.constant 2 : i32
    %50 = vector.broadcast %c2_i32_13 : i32 to vector<8x1x18x18xi32>
    %51 = arith.cmpi sge, %28, %50 : vector<8x1x18x18xi32>
    %c17_i32 = arith.constant 17 : i32
    %52 = vector.broadcast %c17_i32 : i32 to vector<8x1x18x18xi32>
    %53 = arith.cmpi eq, %8, %52 : vector<8x1x18x18xi32>
    %54 = arith.andi %51, %53 : vector<8x1x18x18xi1>
    %55 = arith.ori %49, %54 : vector<8x1x18x18xi1>
    %c0_i32_14 = arith.constant 0 : i32
    %56 = vector.broadcast %c0_i32_14 : i32 to vector<8x1x18x18xi32>
    %57 = arith.cmpi eq, %44, %56 : vector<8x1x18x18xi32>
    %c1_i32_15 = arith.constant 1 : i32
    %58 = vector.broadcast %c1_i32_15 : i32 to vector<8x1x18x18xi32>
    %59 = arith.cmpi slt, %9, %58 : vector<8x1x18x18xi32>
    %60 = arith.andi %57, %59 : vector<8x1x18x18xi1>
    %61 = arith.ori %55, %60 : vector<8x1x18x18xi1>
    %c1_i32_16 = arith.constant 1 : i32
    %62 = vector.broadcast %c1_i32_16 : i32 to vector<8x1x18x18xi32>
    %63 = arith.cmpi eq, %44, %62 : vector<8x1x18x18xi32>
    %c17_i32_17 = arith.constant 17 : i32
    %64 = vector.broadcast %c17_i32_17 : i32 to vector<8x1x18x18xi32>
    %65 = arith.cmpi sge, %9, %64 : vector<8x1x18x18xi32>
    %66 = arith.andi %63, %65 : vector<8x1x18x18xi1>
    %67 = arith.ori %61, %66 : vector<8x1x18x18xi1>
    %cst = arith.constant 0.000000e+00 : f32
    %68 = vector.broadcast %cst : f32 to vector<8x4x18x18xf32>
    %69 = vector.shape_cast %67 : vector<8x1x18x18xi1> to vector<8x1x18x18xi1>
    %70 = vector.broadcast %69 : vector<8x1x18x18xi1> to vector<8x4x18x18xi1>
    %71 = arith.select %70, %68, %6 : vector<8x4x18x18xi1>, vector<8x4x18x18xf32>
    %c0_18 = arith.constant 0 : index
    %c0_19 = arith.constant 0 : index
    %c0_20 = arith.constant 0 : index
    %c0_21 = arith.constant 0 : index
    %72 = vector.load %arg2[%c0_18, %c0_19, %c0_20, %c0_21] : memref<8x4x18x18xf32, #tpu.memory_space<vmem>>, vector<8x4x18x18xf32>
    tpu.vector_store %arg2[%c0_18, %c0_19, %c0_20, %c0_21], %71 {strides = array<i32>} : memref<8x4x18x18xf32, #tpu.memory_space<vmem>>, vector<8x4x18x18xf32>,
    return
  }
  func.func @transform_0(%arg0: i32) -> (i32, i32, i32, i32) {
    %c0_i32 = arith.constant 0 : i32
    %c0_i32_0 = arith.constant 0 : i32
    %c0_i32_1 = arith.constant 0 : i32
    %c0_i32_2 = arith.constant 0 : i32
    return %arg0, %c0_i32, %c0_i32_0, %c0_i32_1 : i32, i32, i32, i32
  }
  func.func @transform_1(%arg0: i32) -> (i32, i32, i32, i32) {
    %c0_i32 = arith.constant 0 : i32
    %c0_i32_0 = arith.constant 0 : i32
    %c0_i32_1 = arith.constant 0 : i32
    %c0_i32_2 = arith.constant 0 : i32
    return %arg0, %c0_i32, %c0_i32_0, %c0_i32_1 : i32, i32, i32, i32
  }
}

</mosaic_0001>

<llo_original>
// kernel: tpu_custom_call.1
$region0: #{tpu_custom_call.1}
  #allocation0 [shape = 'u32[]', space=smem, size = 0x4, offset = 0x4, fixed_abs, tag = 'smem constant byte address 0x4 - core index']
  #allocation1 [shape = 'u32[72,128]{1,0:T(1,128)}', space=vmem, size = 0x9000, scoped, tag = 'internal scratch']
  %s0 = inlined_call_operand.hbm [shape: f32[8,4,16,16], index: 0, kind: input, shape index: {}]
  %s1 = inlined_call_operand.vmem [shape: f32[8,4,18,18], index: 1, kind: output, shape index: {}]
  %s2 = sld [smem:[#allocation0]]
  $region18: #{tpu_custom_call.1} parent=0
    _
  %s4 = ssub.s32 1, %s2
  %s5 = scalar_select 0, %s4, %s2
  $region1: #{tpu_custom_call.1} parent=0
    #allocation2 [shape = 'u8[262144]{0}', space=vmem, size = 0x40000, scoped, tag = 'input window, operand 0, single buffered']
    #allocation3 [shape = 's32[1]{0}', space=sflag, size = 0x4, scoped, tag = 'scoped memory for tpu_custom_call.1']
    %6 = vsyncpa [#allocation3], 0
    // Predicated region
    $region2: #{tpu_custom_call.1} parent=1 // pred_check
      _
    $region3: #{tpu_custom_call.1} parent=1 // pred_check_branch
      %8 = sbr.rel (0) target = $region5
    $region4: #{tpu_custom_call.1} parent=1 // pred_region
      %10 = vsyncadd [#allocation3], 0
      %s11 = sshll.u32 %s0, 4
      %s12 = int_to_ptr.hbm [resolvable:$true] %s11
      %s13 = sshll.u32 [#allocation2], 4
      %s14 = int_to_ptr.vmem [resolvable:$true] %s13
      %19 = dma.hbm_to_vmem [thread:$0]  %s12, 8192, %s14, [#allocation3], 128, 128, 8
    $region5: #{tpu_custom_call.1} parent=1 // pred_fallthru
      _
    // Predicated region
    $region6: #{tpu_custom_call.1} parent=1 // pred_check
      _
    $region7: #{tpu_custom_call.1} parent=1 // pred_check_branch
      %21 = sbr.rel (0) target = $region9
    $region8: #{tpu_custom_call.1} parent=1 // pred_region
      %23 = dma.done [#allocation3], 8192
    $region9: #{tpu_custom_call.1} parent=1 // pred_fallthru
      _
    %v24 = vld [vmem:[#allocation2] sm:$0xff]
    %v25 = vld [vmem:[#allocation2 + $0x8] sm:$0xff]
    %v26 = vld [vmem:[#allocation2 + $0x10] sm:$0xff]
    %v27 = vld [vmem:[#allocation2 + $0x18] sm:$0xff]
    %v28 = vld [vmem:[#allocation2 + $0x20] sm:$0xff]
    %v29 = vld [vmem:[#allocation2 + $0x28] sm:$0xff]
    %v30 = vld [vmem:[#allocation2 + $0x30] sm:$0xff]
    %v31 = vld [vmem:[#allocation2 + $0x38] sm:$0xff]
    %v32 = vld [vmem:[#allocation2 + $0x40] sm:$0xff]
    %v33 = vld [vmem:[#allocation2 + $0x48] sm:$0xff]
    %v34 = vld [vmem:[#allocation2 + $0x50] sm:$0xff]
    %v35 = vld [vmem:[#allocation2 + $0x58] sm:$0xff]
    %v36 = vld [vmem:[#allocation2 + $0x60] sm:$0xff]
    %v37 = vld [vmem:[#allocation2 + $0x68] sm:$0xff]
    %v38 = vld [vmem:[#allocation2 + $0x70] sm:$0xff]
    %v39 = vld [vmem:[#allocation2 + $0x78] sm:$0xff]
    %v40 = vld [vmem:[#allocation2 + $0x80] sm:$0xff]
    %v41 = vld [vmem:[#allocation2 + $0x88] sm:$0xff]
    %v42 = vld [vmem:[#allocation2 + $0x90] sm:$0xff]
    %v43 = vld [vmem:[#allocation2 + $0x98] sm:$0xff]
    %v44 = vld [vmem:[#allocation2 + $0xa0] sm:$0xff]
    %v45 = vld [vmem:[#allocation2 + $0xa8] sm:$0xff]
    %v46 = vld [vmem:[#allocation2 + $0xb0] sm:$0xff]
    %v47 = vld [vmem:[#allocation2 + $0xb8] sm:$0xff]
    %v48 = vld [vmem:[#allocation2 + $0xc0] sm:$0xff]
    %v49 = vld [vmem:[#allocation2 + $0xc8] sm:$0xff]
    %v50 = vld [vmem:[#allocation2 + $0xd0] sm:$0xff]
    %v51 = vld [vmem:[#allocation2 + $0xd8] sm:$0xff]
    %v52 = vld [vmem:[#allocation2 + $0xe0] sm:$0xff]
    %v53 = vld [vmem:[#allocation2 + $0xe8] sm:$0xff]
    %v54 = vld [vmem:[#allocation2 + $0xf0] sm:$0xff]
    %v55 = vld [vmem:[#allocation2 + $0xf8] sm:$0xff]
    %v56 = vld [vmem:[#allocation2 + $0x100] sm:$0xff]
    %v57 = vld [vmem:[#allocation2 + $0x108] sm:$0xff]
    %v58 = vld [vmem:[#allocation2 + $0x110] sm:$0xff]
    %v59 = vld [vmem:[#allocation2 + $0x118] sm:$0xff]
    %v60 = vld [vmem:[#allocation2 + $0x120] sm:$0xff]
    %v61 = vld [vmem:[#allocation2 + $0x128] sm:$0xff]
    %v62 = vld [vmem:[#allocation2 + $0x130] sm:$0xff]
    %v63 = vld [vmem:[#allocation2 + $0x138] sm:$0xff]
    %v64 = vld [vmem:[#allocation2 + $0x140] sm:$0xff]
    %v65 = vld [vmem:[#allocation2 + $0x148] sm:$0xff]
    %v66 = vld [vmem:[#allocation2 + $0x150] sm:$0xff]
    %v67 = vld [vmem:[#allocation2 + $0x158] sm:$0xff]
    %v68 = vld [vmem:[#allocation2 + $0x160] sm:$0xff]
    %v69 = vld [vmem:[#allocation2 + $0x168] sm:$0xff]
    %v70 = vld [vmem:[#allocation2 + $0x170] sm:$0xff]
    %v71 = vld [vmem:[#allocation2 + $0x178] sm:$0xff]
    %v72 = vld [vmem:[#allocation2 + $0x180] sm:$0xff]
    %v73 = vld [vmem:[#allocation2 + $0x188] sm:$0xff]
    %v74 = vld [vmem:[#allocation2 + $0x190] sm:$0xff]
    %v75 = vld [vmem:[#allocation2 + $0x198] sm:$0xff]
    %v76 = vld [vmem:[#allocation2 + $0x1a0] sm:$0xff]
    %v77 = vld [vmem:[#allocation2 + $0x1a8] sm:$0xff]
    %v78 = vld [vmem:[#allocation2 + $0x1b0] sm:$0xff]
    %v79 = vld [vmem:[#allocation2 + $0x1b8] sm:$0xff]
    %v80 = vld [vmem:[#allocation2 + $0x1c0] sm:$0xff]
    %v81 = vld [vmem:[#allocation2 + $0x1c8] sm:$0xff]
    %v82 = vld [vmem:[#allocation2 + $0x1d0] sm:$0xff]
    %v83 = vld [vmem:[#allocation2 + $0x1d8] sm:$0xff]
    %v84 = vld [vmem:[#allocation2 + $0x1e0] sm:$0xff]
    %v85 = vld [vmem:[#allocation2 + $0x1e8] sm:$0xff]
    %v86 = vld [vmem:[#allocation2 + $0x1f0] sm:$0xff]
    %v87 = vld [vmem:[#allocation2 + $0x1f8] sm:$0xff]
    %vm152 = vcmask 1040384
    %v153 = vrot.slane %v24, 7
    %v154 = vrot.slane %v25, 7
    %v155 = vsel %vm152, %v153, %v154
    %v156 = vrot.slane %v26, 7
    %v157 = vrot.slane %v27, 7
    %v158 = vsel %vm152, %v156, %v157
    %v159 = vrot.slane %v28, 7
    %v160 = vrot.slane %v29, 7
    %v161 = vsel %vm152, %v159, %v160
    %v162 = vrot.slane %v30, 7
    %v163 = vrot.slane %v31, 7
    %v164 = vsel %vm152, %v162, %v163
    %v165 = vrot.slane %v32, 7
    %v166 = vrot.slane %v33, 7
    %v167 = vsel %vm152, %v165, %v166
    %v168 = vrot.slane %v34, 7
    %v169 = vrot.slane %v35, 7
    %v170 = vsel %vm152, %v168, %v169
    %v171 = vrot.slane %v36, 7
    %v172 = vrot.slane %v37, 7
    %v173 = vsel %vm152, %v171, %v172
    %v174 = vrot.slane %v38, 7
    %v175 = vrot.slane %v39, 7
    %v176 = vsel %vm152, %v174, %v175
    %v177 = vrot.slane %v40, 7
    %v178 = vrot.slane %v41, 7
    %v179 = vsel %vm152, %v177, %v178
    %v180 = vrot.slane %v42, 7
    %v181 = vrot.slane %v43, 7
    %v182 = vsel %vm152, %v180, %v181
    %v183 = vrot.slane %v44, 7
    %v184 = vrot.slane %v45, 7
    %v185 = vsel %vm152, %v183, %v184
    %v186 = vrot.slane %v46, 7
    %v187 = vrot.slane %v47, 7
    %v188 = vsel %vm152, %v186, %v187
    %v189 = vrot.slane %v48, 7
    %v190 = vrot.slane %v49, 7
    %v191 = vsel %vm152, %v189, %v190
    %v192 = vrot.slane %v50, 7
    %v193 = vrot.slane %v51, 7
    %v194 = vsel %vm152, %v192, %v193
    %v195 = vrot.slane %v52, 7
    %v196 = vrot.slane %v53, 7
    %v197 = vsel %vm152, %v195, %v196
    %v198 = vrot.slane %v54, 7
    %v199 = vrot.slane %v55, 7
    %v200 = vsel %vm152, %v198, %v199
    %v201 = vrot.slane %v56, 7
    %v202 = vrot.slane %v57, 7
    %v203 = vsel %vm152, %v201, %v202
    %v204 = vrot.slane %v58, 7
    %v205 = vrot.slane %v59, 7
    %v206 = vsel %vm152, %v204, %v205
    %v207 = vrot.slane %v60, 7
    %v208 = vrot.slane %v61, 7
    %v209 = vsel %vm152, %v207, %v208
    %v210 = vrot.slane %v62, 7
    %v211 = vrot.slane %v63, 7
    %v212 = vsel %vm152, %v210, %v211
    %v213 = vrot.slane %v64, 7
    %v214 = vrot.slane %v65, 7
    %v215 = vsel %vm152, %v213, %v214
    %v216 = vrot.slane %v66, 7
    %v217 = vrot.slane %v67, 7
    %v218 = vsel %vm152, %v216, %v217
    %v219 = vrot.slane %v68, 7
    %v220 = vrot.slane %v69, 7
    %v221 = vsel %vm152, %v219, %v220
    %v222 = vrot.slane %v70, 7
    %v223 = vrot.slane %v71, 7
    %v224 = vsel %vm152, %v222, %v223
    %v225 = vrot.slane %v72, 7
    %v226 = vrot.slane %v73, 7
    %v227 = vsel %vm152, %v225, %v226
    %v228 = vrot.slane %v74, 7
    %v229 = vrot.slane %v75, 7
    %v230 = vsel %vm152, %v228, %v229
    %v231 = vrot.slane %v76, 7
    %v232 = vrot.slane %v77, 7
    %v233 = vsel %vm152, %v231, %v232
    %v234 = vrot.slane %v78, 7
    %v235 = vrot.slane %v79, 7
    %v236 = vsel %vm152, %v234, %v235
    %v237 = vrot.slane %v80, 7
    %v238 = vrot.slane %v81, 7
    %v239 = vsel %vm152, %v237, %v238
    %v240 = vrot.slane %v82, 7
    %v241 = vrot.slane %v83, 7
    %v242 = vsel %vm152, %v240, %v241
    %v243 = vrot.slane %v84, 7
    %v244 = vrot.slane %v85, 7
    %v245 = vsel %vm152, %v243, %v244
    %v246 = vrot.slane %v86, 7
    %v247 = vrot.slane %v87, 7
    %v248 = vsel %vm152, %v246, %v247
    %v345 = vrot.slane %v25, 6
    %v346 = vrot.slane %v27, 6
    %v347 = vrot.slane %v29, 6
    %v348 = vrot.slane %v31, 6
    %v349 = vrot.slane %v33, 6
    %v350 = vrot.slane %v35, 6
    %v351 = vrot.slane %v37, 6
    %v352 = vrot.slane %v39, 6
    %v353 = vrot.slane %v41, 6
    %v354 = vrot.slane %v43, 6
    %v355 = vrot.slane %v45, 6
    %v356 = vrot.slane %v47, 6
    %v357 = vrot.slane %v49, 6
    %v358 = vrot.slane %v51, 6
    %v359 = vrot.slane %v53, 6
    %v360 = vrot.slane %v55, 6
    %v361 = vrot.slane %v57, 6
    %v362 = vrot.slane %v59, 6
    %v363 = vrot.slane %v61, 6
    %v364 = vrot.slane %v63, 6
    %v365 = vrot.slane %v65, 6
    %v366 = vrot.slane %v67, 6
    %v367 = vrot.slane %v69, 6
    %v368 = vrot.slane %v71, 6
    %v369 = vrot.slane %v73, 6
    %v370 = vrot.slane %v75, 6
    %v371 = vrot.slane %v77, 6
    %v372 = vrot.slane %v79, 6
    %v373 = vrot.slane %v81, 6
    %v374 = vrot.slane %v83, 6
    %v375 = vrot.slane %v85, 6
    %v376 = vrot.slane %v87, 6
    %v409 = vsel %vm152, %v24, %v153
    %v410 = vsel %vm152, %v26, %v156
    %v411 = vsel %vm152, %v28, %v159
    %v412 = vsel %vm152, %v30, %v162
    %v413 = vsel %vm152, %v32, %v165
    %v414 = vsel %vm152, %v34, %v168
    %v415 = vsel %vm152, %v36, %v171
    %v416 = vsel %vm152, %v38, %v174
    %v417 = vsel %vm152, %v40, %v177
    %v418 = vsel %vm152, %v42, %v180
    %v419 = vsel %vm152, %v44, %v183
    %v420 = vsel %vm152, %v46, %v186
    %v421 = vsel %vm152, %v48, %v189
    %v422 = vsel %vm152, %v50, %v192
    %v423 = vsel %vm152, %v52, %v195
    %v424 = vsel %vm152, %v54, %v198
    %v425 = vsel %vm152, %v56, %v201
    %v426 = vsel %vm152, %v58, %v204
    %v427 = vsel %vm152, %v60, %v207
    %v428 = vsel %vm152, %v62, %v210
    %v429 = vsel %vm152, %v64, %v213
    %v430 = vsel %vm152, %v66, %v216
    %v431 = vsel %vm152, %v68, %v219
    %v432 = vsel %vm152, %v70, %v222
    %v433 = vsel %vm152, %v72, %v225
    %v434 = vsel %vm152, %v74, %v228
    %v435 = vsel %vm152, %v76, %v231
    %v436 = vsel %vm152, %v78, %v234
    %v437 = vsel %vm152, %v80, %v237
    %v438 = vsel %vm152, %v82, %v240
    %v439 = vsel %vm152, %v84, %v243
    %v440 = vsel %vm152, %v86, %v246
    %v441 = vsel %vm152, %v154, %v345
    %v442 = vsel %vm152, %v157, %v346
    %v443 = vsel %vm152, %v160, %v347
    %v444 = vsel %vm152, %v163, %v348
    %v445 = vsel %vm152, %v166, %v349
    %v446 = vsel %vm152, %v169, %v350
    %v447 = vsel %vm152, %v172, %v351
    %v448 = vsel %vm152, %v175, %v352
    %v449 = vsel %vm152, %v178, %v353
    %v450 = vsel %vm152, %v181, %v354
    %v451 = vsel %vm152, %v184, %v355
    %v452 = vsel %vm152, %v187, %v356
    %v453 = vsel %vm152, %v190, %v357
    %v454 = vsel %vm152, %v193, %v358
    %v455 = vsel %vm152, %v196, %v359
    %v456 = vsel %vm152, %v199, %v360
    %v457 = vsel %vm152, %v202, %v361
    %v458 = vsel %vm152, %v205, %v362
    %v459 = vsel %vm152, %v208, %v363
    %v460 = vsel %vm152, %v211, %v364
    %v461 = vsel %vm152, %v214, %v365
    %v462 = vsel %vm152, %v217, %v366
    %v463 = vsel %vm152, %v220, %v367
    %v464 = vsel %vm152, %v223, %v368
    %v465 = vsel %vm152, %v226, %v369
    %v466 = vsel %vm152, %v229, %v370
    %v467 = vsel %vm152, %v232, %v371
    %v468 = vsel %vm152, %v235, %v372
    %v469 = vsel %vm152, %v238, %v373
    %v470 = vsel %vm152, %v241, %v374
    %v471 = vsel %vm152, %v244, %v375
    %v472 = vsel %vm152, %v247, %v376
    %537 = vrot.lane.b32.xlu0 %v409, 1
    %v538 = vpop.permute.xlu0 %537
    %539 = vrot.lane.b32.xlu0 %v155, 1
    %v540 = vpop.permute.xlu0 %539
    %541 = vrot.lane.b32.xlu0 %v441, 1
    %v542 = vpop.permute.xlu0 %541
    %543 = vrot.lane.b32.xlu0 %v410, 1
    %v544 = vpop.permute.xlu0 %543
    %545 = vrot.lane.b32.xlu0 %v158, 1
    %v546 = vpop.permute.xlu0 %545
    %547 = vrot.lane.b32.xlu0 %v442, 1
    %v548 = vpop.permute.xlu0 %547
    %549 = vrot.lane.b32.xlu0 %v411, 1
    %v550 = vpop.permute.xlu0 %549
    %551 = vrot.lane.b32.xlu0 %v161, 1
    %v552 = vpop.permute.xlu0 %551
    %553 = vrot.lane.b32.xlu0 %v443, 1
    %v554 = vpop.permute.xlu0 %553
    %555 = vrot.lane.b32.xlu0 %v412, 1
    %v556 = vpop.permute.xlu0 %555
    %557 = vrot.lane.b32.xlu0 %v164, 1
    %v558 = vpop.permute.xlu0 %557
    %559 = vrot.lane.b32.xlu0 %v444, 1
    %v560 = vpop.permute.xlu0 %559
    %561 = vrot.lane.b32.xlu0 %v413, 1
    %v562 = vpop.permute.xlu0 %561
    %563 = vrot.lane.b32.xlu0 %v167, 1
    %v564 = vpop.permute.xlu0 %563
    %565 = vrot.lane.b32.xlu0 %v445, 1
    %v566 = vpop.permute.xlu0 %565
    %567 = vrot.lane.b32.xlu0 %v414, 1
    %v568 = vpop.permute.xlu0 %567
    %569 = vrot.lane.b32.xlu0 %v170, 1
    %v570 = vpop.permute.xlu0 %569
    %571 = vrot.lane.b32.xlu0 %v446, 1
    %v572 = vpop.permute.xlu0 %571
    %573 = vrot.lane.b32.xlu0 %v415, 1
    %v574 = vpop.permute.xlu0 %573
    %575 = vrot.lane.b32.xlu0 %v173, 1
    %v576 = vpop.permute.xlu0 %575
    %577 = vrot.lane.b32.xlu0 %v447, 1
    %v578 = vpop.permute.xlu0 %577
    %579 = vrot.lane.b32.xlu0 %v416, 1
    %v580 = vpop.permute.xlu0 %579
    %581 = vrot.lane.b32.xlu0 %v176, 1
    %v582 = vpop.permute.xlu0 %581
    %583 = vrot.lane.b32.xlu0 %v448, 1
    %v584 = vpop.permute.xlu0 %583
    %585 = vrot.lane.b32.xlu0 %v417, 1
    %v586 = vpop.permute.xlu0 %585
    %587 = vrot.lane.b32.xlu0 %v179, 1
    %v588 = vpop.permute.xlu0 %587
    %589 = vrot.lane.b32.xlu0 %v449, 1
    %v590 = vpop.permute.xlu0 %589
    %591 = vrot.lane.b32.xlu0 %v418, 1
    %v592 = vpop.permute.xlu0 %591
    %593 = vrot.lane.b32.xlu0 %v182, 1
    %v594 = vpop.permute.xlu0 %593
    %595 = vrot.lane.b32.xlu0 %v450, 1
    %v596 = vpop.permute.xlu0 %595
    %597 = vrot.lane.b32.xlu0 %v419, 1
    %v598 = vpop.permute.xlu0 %597
    %599 = vrot.lane.b32.xlu0 %v185, 1
    %v600 = vpop.permute.xlu0 %599
    %601 = vrot.lane.b32.xlu0 %v451, 1
    %v602 = vpop.permute.xlu0 %601
    %603 = vrot.lane.b32.xlu0 %v420, 1
    %v604 = vpop.permute.xlu0 %603
    %605 = vrot.lane.b32.xlu0 %v188, 1
    %v606 = vpop.permute.xlu0 %605
    %607 = vrot.lane.b32.xlu0 %v452, 1
    %v608 = vpop.permute.xlu0 %607
    %609 = vrot.lane.b32.xlu0 %v421, 1
    %v610 = vpop.permute.xlu0 %609
    %611 = vrot.lane.b32.xlu0 %v191, 1
    %v612 = vpop.permute.xlu0 %611
    %613 = vrot.lane.b32.xlu0 %v453, 1
    %v614 = vpop.permute.xlu0 %613
    %615 = vrot.lane.b32.xlu0 %v422, 1
    %v616 = vpop.permute.xlu0 %615
    %617 = vrot.lane.b32.xlu0 %v194, 1
    %v618 = vpop.permute.xlu0 %617
    %619 = vrot.lane.b32.xlu0 %v454, 1
    %v620 = vpop.permute.xlu0 %619
    %621 = vrot.lane.b32.xlu0 %v423, 1
    %v622 = vpop.permute.xlu0 %621
    %623 = vrot.lane.b32.xlu0 %v197, 1
    %v624 = vpop.permute.xlu0 %623
    %625 = vrot.lane.b32.xlu0 %v455, 1
    %v626 = vpop.permute.xlu0 %625
    %627 = vrot.lane.b32.xlu0 %v424, 1
    %v628 = vpop.permute.xlu0 %627
    %629 = vrot.lane.b32.xlu0 %v200, 1
    %v630 = vpop.permute.xlu0 %629
    %631 = vrot.lane.b32.xlu0 %v456, 1
    %v632 = vpop.permute.xlu0 %631
    %633 = vrot.lane.b32.xlu0 %v425, 1
    %v634 = vpop.permute.xlu0 %633
    %635 = vrot.lane.b32.xlu0 %v203, 1
    %v636 = vpop.permute.xlu0 %635
    %637 = vrot.lane.b32.xlu0 %v457, 1
    %v638 = vpop.permute.xlu0 %637
    %639 = vrot.lane.b32.xlu0 %v426, 1
    %v640 = vpop.permute.xlu0 %639
    %641 = vrot.lane.b32.xlu0 %v206, 1
    %v642 = vpop.permute.xlu0 %641
    %643 = vrot.lane.b32.xlu0 %v458, 1
    %v644 = vpop.permute.xlu0 %643
    %645 = vrot.lane.b32.xlu0 %v427, 1
    %v646 = vpop.permute.xlu0 %645
    %647 = vrot.lane.b32.xlu0 %v209, 1
    %v648 = vpop.permute.xlu0 %647
    %649 = vrot.lane.b32.xlu0 %v459, 1
    %v650 = vpop.permute.xlu0 %649
    %651 = vrot.lane.b32.xlu0 %v428, 1
    %v652 = vpop.permute.xlu0 %651
    %653 = vrot.lane.b32.xlu0 %v212, 1
    %v654 = vpop.permute.xlu0 %653
    %655 = vrot.lane.b32.xlu0 %v460, 1
    %v656 = vpop.permute.xlu0 %655
    %657 = vrot.lane.b32.xlu0 %v429, 1
    %v658 = vpop.permute.xlu0 %657
    %659 = vrot.lane.b32.xlu0 %v215, 1
    %v660 = vpop.permute.xlu0 %659
    %661 = vrot.lane.b32.xlu0 %v461, 1
    %v662 = vpop.permute.xlu0 %661
    %663 = vrot.lane.b32.xlu0 %v430, 1
    %v664 = vpop.permute.xlu0 %663
    %665 = vrot.lane.b32.xlu0 %v218, 1
    %v666 = vpop.permute.xlu0 %665
    %667 = vrot.lane.b32.xlu0 %v462, 1
    %v668 = vpop.permute.xlu0 %667
    %669 = vrot.lane.b32.xlu0 %v431, 1
    %v670 = vpop.permute.xlu0 %669
    %671 = vrot.lane.b32.xlu0 %v221, 1
    %v672 = vpop.permute.xlu0 %671
    %673 = vrot.lane.b32.xlu0 %v463, 1
    %v674 = vpop.permute.xlu0 %673
    %675 = vrot.lane.b32.xlu0 %v432, 1
    %v676 = vpop.permute.xlu0 %675
    %677 = vrot.lane.b32.xlu0 %v224, 1
    %v678 = vpop.permute.xlu0 %677
    %679 = vrot.lane.b32.xlu0 %v464, 1
    %v680 = vpop.permute.xlu0 %679
    %681 = vrot.lane.b32.xlu0 %v433, 1
    %v682 = vpop.permute.xlu0 %681
    %683 = vrot.lane.b32.xlu0 %v227, 1
    %v684 = vpop.permute.xlu0 %683
    %685 = vrot.lane.b32.xlu0 %v465, 1
    %v686 = vpop.permute.xlu0 %685
    %687 = vrot.lane.b32.xlu0 %v434, 1
    %v688 = vpop.permute.xlu0 %687
    %689 = vrot.lane.b32.xlu0 %v230, 1
    %v690 = vpop.permute.xlu0 %689
    %691 = vrot.lane.b32.xlu0 %v466, 1
    %v692 = vpop.permute.xlu0 %691
    %693 = vrot.lane.b32.xlu0 %v435, 1
    %v694 = vpop.permute.xlu0 %693
    %695 = vrot.lane.b32.xlu0 %v233, 1
    %v696 = vpop.permute.xlu0 %695
    %697 = vrot.lane.b32.xlu0 %v467, 1
    %v698 = vpop.permute.xlu0 %697
    %699 = vrot.lane.b32.xlu0 %v436, 1
    %v700 = vpop.permute.xlu0 %699
    %701 = vrot.lane.b32.xlu0 %v236, 1
    %v702 = vpop.permute.xlu0 %701
    %703 = vrot.lane.b32.xlu0 %v468, 1
    %v704 = vpop.permute.xlu0 %703
    %705 = vrot.lane.b32.xlu0 %v437, 1
    %v706 = vpop.permute.xlu0 %705
    %707 = vrot.lane.b32.xlu0 %v239, 1
    %v708 = vpop.permute.xlu0 %707
    %709 = vrot.lane.b32.xlu0 %v469, 1
    %v710 = vpop.permute.xlu0 %709
    %711 = vrot.lane.b32.xlu0 %v438, 1
    %v712 = vpop.permute.xlu0 %711
    %713 = vrot.lane.b32.xlu0 %v242, 1
    %v714 = vpop.permute.xlu0 %713
    %715 = vrot.lane.b32.xlu0 %v470, 1
    %v716 = vpop.permute.xlu0 %715
    %717 = vrot.lane.b32.xlu0 %v439, 1
    %v718 = vpop.permute.xlu0 %717
    %719 = vrot.lane.b32.xlu0 %v245, 1
    %v720 = vpop.permute.xlu0 %719
    %721 = vrot.lane.b32.xlu0 %v471, 1
    %v722 = vpop.permute.xlu0 %721
    %723 = vrot.lane.b32.xlu0 %v440, 1
    %v724 = vpop.permute.xlu0 %723
    %725 = vrot.lane.b32.xlu0 %v248, 1
    %v726 = vpop.permute.xlu0 %725
    %727 = vrot.lane.b32.xlu0 %v472, 1
    %v728 = vpop.permute.xlu0 %727
    %825 = vrot.lane.b32.xlu0 %v409, 2
    %v826 = vpop.permute.xlu0 %825
    %827 = vrot.lane.b32.xlu0 %v155, 2
    %v828 = vpop.permute.xlu0 %827
    %829 = vrot.lane.b32.xlu0 %v441, 2
    %v830 = vpop.permute.xlu0 %829
    %831 = vrot.lane.b32.xlu0 %v410, 2
    %v832 = vpop.permute.xlu0 %831
    %833 = vrot.lane.b32.xlu0 %v158, 2
    %v834 = vpop.permute.xlu0 %833
    %835 = vrot.lane.b32.xlu0 %v442, 2
    %v836 = vpop.permute.xlu0 %835
    %837 = vrot.lane.b32.xlu0 %v411, 2
    %v838 = vpop.permute.xlu0 %837
    %839 = vrot.lane.b32.xlu0 %v161, 2
    %v840 = vpop.permute.xlu0 %839
    %841 = vrot.lane.b32.xlu0 %v443, 2
    %v842 = vpop.permute.xlu0 %841
    %843 = vrot.lane.b32.xlu0 %v412, 2
    %v844 = vpop.permute.xlu0 %843
    %845 = vrot.lane.b32.xlu0 %v164, 2
    %v846 = vpop.permute.xlu0 %845
    %847 = vrot.lane.b32.xlu0 %v444, 2
    %v848 = vpop.permute.xlu0 %847
    %849 = vrot.lane.b32.xlu0 %v413, 2
    %v850 = vpop.permute.xlu0 %849
    %851 = vrot.lane.b32.xlu0 %v167, 2
    %v852 = vpop.permute.xlu0 %851
    %853 = vrot.lane.b32.xlu0 %v445, 2
    %v854 = vpop.permute.xlu0 %853
    %855 = vrot.lane.b32.xlu0 %v414, 2
    %v856 = vpop.permute.xlu0 %855
    %857 = vrot.lane.b32.xlu0 %v170, 2
    %v858 = vpop.permute.xlu0 %857
    %859 = vrot.lane.b32.xlu0 %v446, 2
    %v860 = vpop.permute.xlu0 %859
    %861 = vrot.lane.b32.xlu0 %v415, 2
    %v862 = vpop.permute.xlu0 %861
    %863 = vrot.lane.b32.xlu0 %v173, 2
    %v864 = vpop.permute.xlu0 %863
    %865 = vrot.lane.b32.xlu0 %v447, 2
    %v866 = vpop.permute.xlu0 %865
    %867 = vrot.lane.b32.xlu0 %v416, 2
    %v868 = vpop.permute.xlu0 %867
    %869 = vrot.lane.b32.xlu0 %v176, 2
    %v870 = vpop.permute.xlu0 %869
    %871 = vrot.lane.b32.xlu0 %v448, 2
    %v872 = vpop.permute.xlu0 %871
    %873 = vrot.lane.b32.xlu0 %v417, 2
    %v874 = vpop.permute.xlu0 %873
    %875 = vrot.lane.b32.xlu0 %v179, 2
    %v876 = vpop.permute.xlu0 %875
    %877 = vrot.lane.b32.xlu0 %v449, 2
    %v878 = vpop.permute.xlu0 %877
    %879 = vrot.lane.b32.xlu0 %v418, 2
    %v880 = vpop.permute.xlu0 %879
    %881 = vrot.lane.b32.xlu0 %v182, 2
    %v882 = vpop.permute.xlu0 %881
    %883 = vrot.lane.b32.xlu0 %v450, 2
    %v884 = vpop.permute.xlu0 %883
    %885 = vrot.lane.b32.xlu0 %v419, 2
    %v886 = vpop.permute.xlu0 %885
    %887 = vrot.lane.b32.xlu0 %v185, 2
    %v888 = vpop.permute.xlu0 %887
    %889 = vrot.lane.b32.xlu0 %v451, 2
    %v890 = vpop.permute.xlu0 %889
    %891 = vrot.lane.b32.xlu0 %v420, 2
    %v892 = vpop.permute.xlu0 %891
    %893 = vrot.lane.b32.xlu0 %v188, 2
    %v894 = vpop.permute.xlu0 %893
    %895 = vrot.lane.b32.xlu0 %v452, 2
    %v896 = vpop.permute.xlu0 %895
    %897 = vrot.lane.b32.xlu0 %v421, 2
    %v898 = vpop.permute.xlu0 %897
    %899 = vrot.lane.b32.xlu0 %v191, 2
    %v900 = vpop.permute.xlu0 %899
    %901 = vrot.lane.b32.xlu0 %v453, 2
    %v902 = vpop.permute.xlu0 %901
    %903 = vrot.lane.b32.xlu0 %v422, 2
    %v904 = vpop.permute.xlu0 %903
    %905 = vrot.lane.b32.xlu0 %v194, 2
    %v906 = vpop.permute.xlu0 %905
    %907 = vrot.lane.b32.xlu0 %v454, 2
    %v908 = vpop.permute.xlu0 %907
    %909 = vrot.lane.b32.xlu0 %v423, 2
    %v910 = vpop.permute.xlu0 %909
    %911 = vrot.lane.b32.xlu0 %v197, 2
    %v912 = vpop.permute.xlu0 %911
    %913 = vrot.lane.b32.xlu0 %v455, 2
    %v914 = vpop.permute.xlu0 %913
    %915 = vrot.lane.b32.xlu0 %v424, 2
    %v916 = vpop.permute.xlu0 %915
    %917 = vrot.lane.b32.xlu0 %v200, 2
    %v918 = vpop.permute.xlu0 %917
    %919 = vrot.lane.b32.xlu0 %v456, 2
    %v920 = vpop.permute.xlu0 %919
    %921 = vrot.lane.b32.xlu0 %v425, 2
    %v922 = vpop.permute.xlu0 %921
    %923 = vrot.lane.b32.xlu0 %v203, 2
    %v924 = vpop.permute.xlu0 %923
    %925 = vrot.lane.b32.xlu0 %v457, 2
    %v926 = vpop.permute.xlu0 %925
    %927 = vrot.lane.b32.xlu0 %v426, 2
    %v928 = vpop.permute.xlu0 %927
    %929 = vrot.lane.b32.xlu0 %v206, 2
    %v930 = vpop.permute.xlu0 %929
    %931 = vrot.lane.b32.xlu0 %v458, 2
    %v932 = vpop.permute.xlu0 %931
    %933 = vrot.lane.b32.xlu0 %v427, 2
    %v934 = vpop.permute.xlu0 %933
    %935 = vrot.lane.b32.xlu0 %v209, 2
    %v936 = vpop.permute.xlu0 %935
    %937 = vrot.lane.b32.xlu0 %v459, 2
    %v938 = vpop.permute.xlu0 %937
    %939 = vrot.lane.b32.xlu0 %v428, 2
    %v940 = vpop.permute.xlu0 %939
    %941 = vrot.lane.b32.xlu0 %v212, 2
    %v942 = vpop.permute.xlu0 %941
    %943 = vrot.lane.b32.xlu0 %v460, 2
    %v944 = vpop.permute.xlu0 %943
    %945 = vrot.lane.b32.xlu0 %v429, 2
    %v946 = vpop.permute.xlu0 %945
    %947 = vrot.lane.b32.xlu0 %v215, 2
    %v948 = vpop.permute.xlu0 %947
    %949 = vrot.lane.b32.xlu0 %v461, 2
    %v950 = vpop.permute.xlu0 %949
    %951 = vrot.lane.b32.xlu0 %v430, 2
    %v952 = vpop.permute.xlu0 %951
    %953 = vrot.lane.b32.xlu0 %v218, 2
    %v954 = vpop.permute.xlu0 %953
    %955 = vrot.lane.b32.xlu0 %v462, 2
    %v956 = vpop.permute.xlu0 %955
    %957 = vrot.lane.b32.xlu0 %v431, 2
    %v958 = vpop.permute.xlu0 %957
    %959 = vrot.lane.b32.xlu0 %v221, 2
    %v960 = vpop.permute.xlu0 %959
    %961 = vrot.lane.b32.xlu0 %v463, 2
    %v962 = vpop.permute.xlu0 %961
    %963 = vrot.lane.b32.xlu0 %v432, 2
    %v964 = vpop.permute.xlu0 %963
    %965 = vrot.lane.b32.xlu0 %v224, 2
    %v966 = vpop.permute.xlu0 %965
    %967 = vrot.lane.b32.xlu0 %v464, 2
    %v968 = vpop.permute.xlu0 %967
    %969 = vrot.lane.b32.xlu0 %v433, 2
    %v970 = vpop.permute.xlu0 %969
    %971 = vrot.lane.b32.xlu0 %v227, 2
    %v972 = vpop.permute.xlu0 %971
    %973 = vrot.lane.b32.xlu0 %v465, 2
    %v974 = vpop.permute.xlu0 %973
    %975 = vrot.lane.b32.xlu0 %v434, 2
    %v976 = vpop.permute.xlu0 %975
    %977 = vrot.lane.b32.xlu0 %v230, 2
    %v978 = vpop.permute.xlu0 %977
    %979 = vrot.lane.b32.xlu0 %v466, 2
    %v980 = vpop.permute.xlu0 %979
    %981 = vrot.lane.b32.xlu0 %v435, 2
    %v982 = vpop.permute.xlu0 %981
    %983 = vrot.lane.b32.xlu0 %v233, 2
    %v984 = vpop.permute.xlu0 %983
    %985 = vrot.lane.b32.xlu0 %v467, 2
    %v986 = vpop.permute.xlu0 %985
    %987 = vrot.lane.b32.xlu0 %v436, 2
    %v988 = vpop.permute.xlu0 %987
    %989 = vrot.lane.b32.xlu0 %v236, 2
    %v990 = vpop.permute.xlu0 %989
    %991 = vrot.lane.b32.xlu0 %v468, 2
    %v992 = vpop.permute.xlu0 %991
    %993 = vrot.lane.b32.xlu0 %v437, 2
    %v994 = vpop.permute.xlu0 %993
    %995 = vrot.lane.b32.xlu0 %v239, 2
    %v996 = vpop.permute.xlu0 %995
    %997 = vrot.lane.b32.xlu0 %v469, 2
    %v998 = vpop.permute.xlu0 %997
    %999 = vrot.lane.b32.xlu0 %v438, 2
    %v1000 = vpop.permute.xlu0 %999
    %1001 = vrot.lane.b32.xlu0 %v242, 2
    %v1002 = vpop.permute.xlu0 %1001
    %1003 = vrot.lane.b32.xlu0 %v470, 2
    %v1004 = vpop.permute.xlu0 %1003
    %1005 = vrot.lane.b32.xlu0 %v439, 2
    %v1006 = vpop.permute.xlu0 %1005
    %1007 = vrot.lane.b32.xlu0 %v245, 2
    %v1008 = vpop.permute.xlu0 %1007
    %1009 = vrot.lane.b32.xlu0 %v471, 2
    %v1010 = vpop.permute.xlu0 %1009
    %1011 = vrot.lane.b32.xlu0 %v440, 2
    %v1012 = vpop.permute.xlu0 %1011
    %1013 = vrot.lane.b32.xlu0 %v248, 2
    %v1014 = vpop.permute.xlu0 %1013
    %1015 = vrot.lane.b32.xlu0 %v472, 2
    %v1016 = vpop.permute.xlu0 %1015
    %vm1113 = vcmask 7168
    %v1114 = vsel %vm1113, %v409, %v538
    %v1115 = vsel %vm1113, %v155, %v540
    %v1116 = vsel %vm1113, %v441, %v542
    %v1117 = vsel %vm1113, %v410, %v544
    %v1118 = vsel %vm1113, %v158, %v546
    %v1119 = vsel %vm1113, %v442, %v548
    %v1120 = vsel %vm1113, %v411, %v550
    %v1121 = vsel %vm1113, %v161, %v552
    %v1122 = vsel %vm1113, %v443, %v554
    %v1123 = vsel %vm1113, %v412, %v556
    %v1124 = vsel %vm1113, %v164, %v558
    %v1125 = vsel %vm1113, %v444, %v560
    %v1126 = vsel %vm1113, %v413, %v562
    %v1127 = vsel %vm1113, %v167, %v564
    %v1128 = vsel %vm1113, %v445, %v566
    %v1129 = vsel %vm1113, %v414, %v568
    %v1130 = vsel %vm1113, %v170, %v570
    %v1131 = vsel %vm1113, %v446, %v572
    %v1132 = vsel %vm1113, %v415, %v574
    %v1133 = vsel %vm1113, %v173, %v576
    %v1134 = vsel %vm1113, %v447, %v578
    %v1135 = vsel %vm1113, %v416, %v580
    %v1136 = vsel %vm1113, %v176, %v582
    %v1137 = vsel %vm1113, %v448, %v584
    %v1138 = vsel %vm1113, %v417, %v586
    %v1139 = vsel %vm1113, %v179, %v588
    %v1140 = vsel %vm1113, %v449, %v590
    %v1141 = vsel %vm1113, %v418, %v592
    %v1142 = vsel %vm1113, %v182, %v594
    %v1143 = vsel %vm1113, %v450, %v596
    %v1144 = vsel %vm1113, %v419, %v598
    %v1145 = vsel %vm1113, %v185, %v600
    %v1146 = vsel %vm1113, %v451, %v602
    %v1147 = vsel %vm1113, %v420, %v604
    %v1148 = vsel %vm1113, %v188, %v606
    %v1149 = vsel %vm1113, %v452, %v608
    %v1150 = vsel %vm1113, %v421, %v610
    %v1151 = vsel %vm1113, %v191, %v612
    %v1152 = vsel %vm1113, %v453, %v614
    %v1153 = vsel %vm1113, %v422, %v616
    %v1154 = vsel %vm1113, %v194, %v618
    %v1155 = vsel %vm1113, %v454, %v620
    %v1156 = vsel %vm1113, %v423, %v622
    %v1157 = vsel %vm1113, %v197, %v624
    %v1158 = vsel %vm1113, %v455, %v626
    %v1159 = vsel %vm1113, %v424, %v628
    %v1160 = vsel %vm1113, %v200, %v630
    %v1161 = vsel %vm1113, %v456, %v632
    %v1162 = vsel %vm1113, %v425, %v634
    %v1163 = vsel %vm1113, %v203, %v636
    %v1164 = vsel %vm1113, %v457, %v638
    %v1165 = vsel %vm1113, %v426, %v640
    %v1166 = vsel %vm1113, %v206, %v642
    %v1167 = vsel %vm1113, %v458, %v644
    %v1168 = vsel %vm1113, %v427, %v646
    %v1169 = vsel %vm1113, %v209, %v648
    %v1170 = vsel %vm1113, %v459, %v650
    %v1171 = vsel %vm1113, %v428, %v652
    %v1172 = vsel %vm1113, %v212, %v654
    %v1173 = vsel %vm1113, %v460, %v656
    %v1174 = vsel %vm1113, %v429, %v658
    %v1175 = vsel %vm1113, %v215, %v660
    %v1176 = vsel %vm1113, %v461, %v662
    %v1177 = vsel %vm1113, %v430, %v664
    %v1178 = vsel %vm1113, %v218, %v666
    %v1179 = vsel %vm1113, %v462, %v668
    %v1180 = vsel %vm1113, %v431, %v670
    %v1181 = vsel %vm1113, %v221, %v672
    %v1182 = vsel %vm1113, %v463, %v674
    %v1183 = vsel %vm1113, %v432, %v676
    %v1184 = vsel %vm1113, %v224, %v678
    %v1185 = vsel %vm1113, %v464, %v680
    %v1186 = vsel %vm1113, %v433, %v682
    %v1187 = vsel %vm1113, %v227, %v684
    %v1188 = vsel %vm1113, %v465, %v686
    %v1189 = vsel %vm1113, %v434, %v688
    %v1190 = vsel %vm1113, %v230, %v690
    %v1191 = vsel %vm1113, %v466, %v692
    %v1192 = vsel %vm1113, %v435, %v694
    %v1193 = vsel %vm1113, %v233, %v696
    %v1194 = vsel %vm1113, %v467, %v698
    %v1195 = vsel %vm1113, %v436, %v700
    %v1196 = vsel %vm1113, %v236, %v702
    %v1197 = vsel %vm1113, %v468, %v704
    %v1198 = vsel %vm1113, %v437, %v706
    %v1199 = vsel %vm1113, %v239, %v708
    %v1200 = vsel %vm1113, %v469, %v710
    %v1201 = vsel %vm1113, %v438, %v712
    %v1202 = vsel %vm1113, %v242, %v714
    %v1203 = vsel %vm1113, %v470, %v716
    %v1204 = vsel %vm1113, %v439, %v718
    %v1205 = vsel %vm1113, %v245, %v720
    %v1206 = vsel %vm1113, %v471, %v722
    %v1207 = vsel %vm1113, %v440, %v724
    %v1208 = vsel %vm1113, %v248, %v726
    %v1209 = vsel %vm1113, %v472, %v728
    %vm1210 = vcmask 138240
    %v1211 = vsel %vm1210, %v1114, %v826
    %v1212 = vsel %vm1210, %v1115, %v828
    %v1213 = vsel %vm1210, %v1116, %v830
    %v1214 = vsel %vm1210, %v1117, %v832
    %v1215 = vsel %vm1210, %v1118, %v834
    %v1216 = vsel %vm1210, %v1119, %v836
    %v1217 = vsel %vm1210, %v1120, %v838
    %v1218 = vsel %vm1210, %v1121, %v840
    %v1219 = vsel %vm1210, %v1122, %v842
    %v1220 = vsel %vm1210, %v1123, %v844
    %v1221 = vsel %vm1210, %v1124, %v846
    %v1222 = vsel %vm1210, %v1125, %v848
    %v1223 = vsel %vm1210, %v1126, %v850
    %v1224 = vsel %vm1210, %v1127, %v852
    %v1225 = vsel %vm1210, %v1128, %v854
    %v1226 = vsel %vm1210, %v1129, %v856
    %v1227 = vsel %vm1210, %v1130, %v858
    %v1228 = vsel %vm1210, %v1131, %v860
    %v1229 = vsel %vm1210, %v1132, %v862
    %v1230 = vsel %vm1210, %v1133, %v864
    %v1231 = vsel %vm1210, %v1134, %v866
    %v1232 = vsel %vm1210, %v1135, %v868
    %v1233 = vsel %vm1210, %v1136, %v870
    %v1234 = vsel %vm1210, %v1137, %v872
    %v1235 = vsel %vm1210, %v1138, %v874
    %v1236 = vsel %vm1210, %v1139, %v876
    %v1237 = vsel %vm1210, %v1140, %v878
    %v1238 = vsel %vm1210, %v1141, %v880
    %v1239 = vsel %vm1210, %v1142, %v882
    %v1240 = vsel %vm1210, %v1143, %v884
    %v1241 = vsel %vm1210, %v1144, %v886
    %v1242 = vsel %vm1210, %v1145, %v888
    %v1243 = vsel %vm1210, %v1146, %v890
    %v1244 = vsel %vm1210, %v1147, %v892
    %v1245 = vsel %vm1210, %v1148, %v894
    %v1246 = vsel %vm1210, %v1149, %v896
    %v1247 = vsel %vm1210, %v1150, %v898
    %v1248 = vsel %vm1210, %v1151, %v900
    %v1249 = vsel %vm1210, %v1152, %v902
    %v1250 = vsel %vm1210, %v1153, %v904
    %v1251 = vsel %vm1210, %v1154, %v906
    %v1252 = vsel %vm1210, %v1155, %v908
    %v1253 = vsel %vm1210, %v1156, %v910
    %v1254 = vsel %vm1210, %v1157, %v912
    %v1255 = vsel %vm1210, %v1158, %v914
    %v1256 = vsel %vm1210, %v1159, %v916
    %v1257 = vsel %vm1210, %v1160, %v918
    %v1258 = vsel %vm1210, %v1161, %v920
    %v1259 = vsel %vm1210, %v1162, %v922
    %v1260 = vsel %vm1210, %v1163, %v924
    %v1261 = vsel %vm1210, %v1164, %v926
    %v1262 = vsel %vm1210, %v1165, %v928
    %v1263 = vsel %vm1210, %v1166, %v930
    %v1264 = vsel %vm1210, %v1167, %v932
    %v1265 = vsel %vm1210, %v1168, %v934
    %v1266 = vsel %vm1210, %v1169, %v936
    %v1267 = vsel %vm1210, %v1170, %v938
    %v1268 = vsel %vm1210, %v1171, %v940
    %v1269 = vsel %vm1210, %v1172, %v942
    %v1270 = vsel %vm1210, %v1173, %v944
    %v1271 = vsel %vm1210, %v1174, %v946
    %v1272 = vsel %vm1210, %v1175, %v948
    %v1273 = vsel %vm1210, %v1176, %v950
    %v1274 = vsel %vm1210, %v1177, %v952
    %v1275 = vsel %vm1210, %v1178, %v954
    %v1276 = vsel %vm1210, %v1179, %v956
    %v1277 = vsel %vm1210, %v1180, %v958
    %v1278 = vsel %vm1210, %v1181, %v960
    %v1279 = vsel %vm1210, %v1182, %v962
    %v1280 = vsel %vm1210, %v1183, %v964
    %v1281 = vsel %vm1210, %v1184, %v966
    %v1282 = vsel %vm1210, %v1185, %v968
    %v1283 = vsel %vm1210, %v1186, %v970
    %v1284 = vsel %vm1210, %v1187, %v972
    %v1285 = vsel %vm1210, %v1188, %v974
    %v1286 = vsel %vm1210, %v1189, %v976
    %v1287 = vsel %vm1210, %v1190, %v978
    %v1288 = vsel %vm1210, %v1191, %v980
    %v1289 = vsel %vm1210, %v1192, %v982
    %v1290 = vsel %vm1210, %v1193, %v984
    %v1291 = vsel %vm1210, %v1194, %v986
    %v1292 = vsel %vm1210, %v1195, %v988
    %v1293 = vsel %vm1210, %v1196, %v990
    %v1294 = vsel %vm1210, %v1197, %v992
    %v1295 = vsel %vm1210, %v1198, %v994
    %v1296 = vsel %vm1210, %v1199, %v996
    %v1297 = vsel %vm1210, %v1200, %v998
    %v1298 = vsel %vm1210, %v1201, %v1000
    %v1299 = vsel %vm1210, %v1202, %v1002
    %v1300 = vsel %vm1210, %v1203, %v1004
    %v1301 = vsel %vm1210, %v1204, %v1006
    %v1302 = vsel %vm1210, %v1205, %v1008
    %v1303 = vsel %vm1210, %v1206, %v1010
    %v1304 = vsel %vm1210, %v1207, %v1012
    %v1305 = vsel %vm1210, %v1208, %v1014
    %v1306 = vsel %vm1210, %v1209, %v1016
    %v1307 = vlaneseq
    %v1308 = vshrl.u32 %v1307, 7
    %v1309 = vadd.s32 %v1308, 8
    %v1310 = vadd.s32 %v1308, 16
    %v1311 = vlaneseq
    %v1312 = vand.u32 %v1311, 127
    %s1313 = smul.u32 0, 8
    %v1314 = vstv %s1313
    %v1315 = vadd.s32 %v1314, 1
    %v1316 = vadd.s32 %v1314, 2
    %v1317 = vadd.s32 %v1314, 3
    %v1318 = vadd.s32 %v1314, 4
    %v1319 = vadd.s32 %v1314, 5
    %v1320 = vadd.s32 %v1314, 6
    %v1321 = vadd.s32 %v1314, 7
    %vm1322 = vcmp.lt.s32.totalorder %v1314, 0
    %v1323 = vsub.s32 0, %v1314
    %v1324 = vsel %vm1322, %v1323, %v1314
    %v1325 = vshrl.u32 %v1324, 2
    %v1326 = vand.u32 %v1324, 3
    %v1327 = vsub.s32 0, %v1326
    %v1328 = vsel %vm1322, %v1327, %v1326
    %vm1329 = vcmp.lt.s32.totalorder %v1315, 0
    %v1330 = vsub.s32 0, %v1315
    %v1331 = vsel %vm1329, %v1330, %v1315
    %v1332 = vshrl.u32 %v1331, 2
    %v1333 = vand.u32 %v1331, 3
    %v1334 = vsub.s32 0, %v1333
    %v1335 = vsel %vm1329, %v1334, %v1333
    %vm1336 = vcmp.lt.s32.totalorder %v1316, 0
    %v1337 = vsub.s32 0, %v1316
    %v1338 = vsel %vm1336, %v1337, %v1316
    %v1339 = vshrl.u32 %v1338, 2
    %v1340 = vand.u32 %v1338, 3
    %v1341 = vsub.s32 0, %v1340
    %v1342 = vsel %vm1336, %v1341, %v1340
    %vm1343 = vcmp.lt.s32.totalorder %v1317, 0
    %v1344 = vsub.s32 0, %v1317
    %v1345 = vsel %vm1343, %v1344, %v1317
    %v1346 = vshrl.u32 %v1345, 2
    %v1347 = vand.u32 %v1345, 3
    %v1348 = vsub.s32 0, %v1347
    %v1349 = vsel %vm1343, %v1348, %v1347
    %vm1350 = vcmp.lt.s32.totalorder %v1318, 0
    %v1351 = vsub.s32 0, %v1318
    %v1352 = vsel %vm1350, %v1351, %v1318
    %v1353 = vshrl.u32 %v1352, 2
    %v1354 = vand.u32 %v1352, 3
    %v1355 = vsub.s32 0, %v1354
    %v1356 = vsel %vm1350, %v1355, %v1354
    %vm1357 = vcmp.lt.s32.totalorder %v1319, 0
    %v1358 = vsub.s32 0, %v1319
    %v1359 = vsel %vm1357, %v1358, %v1319
    %v1360 = vshrl.u32 %v1359, 2
    %v1361 = vand.u32 %v1359, 3
    %v1362 = vsub.s32 0, %v1361
    %v1363 = vsel %vm1357, %v1362, %v1361
    %vm1364 = vcmp.lt.s32.totalorder %v1320, 0
    %v1365 = vsub.s32 0, %v1320
    %v1366 = vsel %vm1364, %v1365, %v1320
    %v1367 = vshrl.u32 %v1366, 2
    %v1368 = vand.u32 %v1366, 3
    %v1369 = vsub.s32 0, %v1368
    %v1370 = vsel %vm1364, %v1369, %v1368
    %vm1371 = vcmp.lt.s32.totalorder %v1321, 0
    %v1372 = vsub.s32 0, %v1321
    %v1373 = vsel %vm1371, %v1372, %v1321
    %v1374 = vshrl.u32 %v1373, 2
    %v1375 = vand.u32 %v1373, 3
    %v1376 = vsub.s32 0, %v1375
    %v1377 = vsel %vm1371, %v1376, %v1375
    %vm1378 = vcmp.ne.s32.totalorder %v1328, 0
    %vm1379 = vcmp.ne.s32.totalorder %v1335, 0
    %vm1380 = vcmp.ne.s32.totalorder %v1342, 0
    %vm1381 = vcmp.ne.s32.totalorder %v1349, 0
    %vm1382 = vcmp.ne.s32.totalorder %v1356, 0
    %vm1383 = vcmp.ne.s32.totalorder %v1363, 0
    %vm1384 = vcmp.ne.s32.totalorder %v1370, 0
    %vm1385 = vcmp.ne.s32.totalorder %v1377, 0
    %vm1386 = vcmp.lt.s32.totalorder %v1328, 0
    %vm1387 = vcmp.lt.s32.totalorder %v1335, 0
    %vm1388 = vcmp.lt.s32.totalorder %v1342, 0
    %vm1389 = vcmp.lt.s32.totalorder %v1349, 0
    %vm1390 = vcmp.lt.s32.totalorder %v1356, 0
    %vm1391 = vcmp.lt.s32.totalorder %v1363, 0
    %vm1392 = vcmp.lt.s32.totalorder %v1370, 0
    %vm1393 = vcmp.lt.s32.totalorder %v1377, 0
    %vm1394 = vmand %vm1386, %vm1378
    %vm1395 = vmand %vm1387, %vm1379
    %vm1396 = vmand %vm1388, %vm1380
    %vm1397 = vmand %vm1389, %vm1381
    %vm1398 = vmand %vm1390, %vm1382
    %vm1399 = vmand %vm1391, %vm1383
    %vm1400 = vmand %vm1392, %vm1384
    %vm1401 = vmand %vm1393, %vm1385
    %v1402 = vadd.s32 %v1328, 4
    %v1403 = vadd.s32 %v1335, 4
    %v1404 = vadd.s32 %v1342, 4
    %v1405 = vadd.s32 %v1349, 4
    %v1406 = vadd.s32 %v1356, 4
    %v1407 = vadd.s32 %v1363, 4
    %v1408 = vadd.s32 %v1370, 4
    %v1409 = vadd.s32 %v1377, 4
    %v1410 = vsel %vm1394, %v1402, %v1328
    %v1411 = vsel %vm1395, %v1403, %v1335
    %v1412 = vsel %vm1396, %v1404, %v1342
    %v1413 = vsel %vm1397, %v1405, %v1349
    %v1414 = vsel %vm1398, %v1406, %v1356
    %v1415 = vsel %vm1399, %v1407, %v1363
    %v1416 = vsel %vm1400, %v1408, %v1370
    %v1417 = vsel %vm1401, %v1409, %v1377
    %vm1418 = vcmp.lt.s32.totalorder %v1314, 0
    %v1419 = vsub.s32 0, %v1314
    %v1420 = vsel %vm1418, %v1419, %v1314
    %v1421 = vshrl.u32 %v1420, 1
    %v1422 = vand.u32 %v1420, 1
    %v1423 = vsub.s32 0, %v1422
    %v1424 = vsel %vm1418, %v1423, %v1422
    %vm1425 = vcmp.lt.s32.totalorder %v1315, 0
    %v1426 = vsub.s32 0, %v1315
    %v1427 = vsel %vm1425, %v1426, %v1315
    %v1428 = vshrl.u32 %v1427, 1
    %v1429 = vand.u32 %v1427, 1
    %v1430 = vsub.s32 0, %v1429
    %v1431 = vsel %vm1425, %v1430, %v1429
    %vm1432 = vcmp.lt.s32.totalorder %v1316, 0
    %v1433 = vsub.s32 0, %v1316
    %v1434 = vsel %vm1432, %v1433, %v1316
    %v1435 = vshrl.u32 %v1434, 1
    %v1436 = vand.u32 %v1434, 1
    %v1437 = vsub.s32 0, %v1436
    %v1438 = vsel %vm1432, %v1437, %v1436
    %vm1439 = vcmp.lt.s32.totalorder %v1317, 0
    %v1440 = vsub.s32 0, %v1317
    %v1441 = vsel %vm1439, %v1440, %v1317
    %v1442 = vshrl.u32 %v1441, 1
    %v1443 = vand.u32 %v1441, 1
    %v1444 = vsub.s32 0, %v1443
    %v1445 = vsel %vm1439, %v1444, %v1443
    %vm1446 = vcmp.lt.s32.totalorder %v1318, 0
    %v1447 = vsub.s32 0, %v1318
    %v1448 = vsel %vm1446, %v1447, %v1318
    %v1449 = vshrl.u32 %v1448, 1
    %v1450 = vand.u32 %v1448, 1
    %v1451 = vsub.s32 0, %v1450
    %v1452 = vsel %vm1446, %v1451, %v1450
    %vm1453 = vcmp.lt.s32.totalorder %v1319, 0
    %v1454 = vsub.s32 0, %v1319
    %v1455 = vsel %vm1453, %v1454, %v1319
    %v1456 = vshrl.u32 %v1455, 1
    %v1457 = vand.u32 %v1455, 1
    %v1458 = vsub.s32 0, %v1457
    %v1459 = vsel %vm1453, %v1458, %v1457
    %vm1460 = vcmp.lt.s32.totalorder %v1320, 0
    %v1461 = vsub.s32 0, %v1320
    %v1462 = vsel %vm1460, %v1461, %v1320
    %v1463 = vshrl.u32 %v1462, 1
    %v1464 = vand.u32 %v1462, 1
    %v1465 = vsub.s32 0, %v1464
    %v1466 = vsel %vm1460, %v1465, %v1464
    %vm1467 = vcmp.lt.s32.totalorder %v1321, 0
    %v1468 = vsub.s32 0, %v1321
    %v1469 = vsel %vm1467, %v1468, %v1321
    %v1470 = vshrl.u32 %v1469, 1
    %v1471 = vand.u32 %v1469, 1
    %v1472 = vsub.s32 0, %v1471
    %v1473 = vsel %vm1467, %v1472, %v1471
    %vm1474 = vcmp.ne.s32.totalorder %v1424, 0
    %vm1475 = vcmp.ne.s32.totalorder %v1431, 0
    %vm1476 = vcmp.ne.s32.totalorder %v1438, 0
    %vm1477 = vcmp.ne.s32.totalorder %v1445, 0
    %vm1478 = vcmp.ne.s32.totalorder %v1452, 0
    %vm1479 = vcmp.ne.s32.totalorder %v1459, 0
    %vm1480 = vcmp.ne.s32.totalorder %v1466, 0
    %vm1481 = vcmp.ne.s32.totalorder %v1473, 0
    %vm1482 = vcmp.lt.s32.totalorder %v1424, 0
    %vm1483 = vcmp.lt.s32.totalorder %v1431, 0
    %vm1484 = vcmp.lt.s32.totalorder %v1438, 0
    %vm1485 = vcmp.lt.s32.totalorder %v1445, 0
    %vm1486 = vcmp.lt.s32.totalorder %v1452, 0
    %vm1487 = vcmp.lt.s32.totalorder %v1459, 0
    %vm1488 = vcmp.lt.s32.totalorder %v1466, 0
    %vm1489 = vcmp.lt.s32.totalorder %v1473, 0
    %vm1490 = vmand %vm1482, %vm1474
    %vm1491 = vmand %vm1483, %vm1475
    %vm1492 = vmand %vm1484, %vm1476
    %vm1493 = vmand %vm1485, %vm1477
    %vm1494 = vmand %vm1486, %vm1478
    %vm1495 = vmand %vm1487, %vm1479
    %vm1496 = vmand %vm1488, %vm1480
    %vm1497 = vmand %vm1489, %vm1481
    %v1498 = vadd.s32 %v1424, 2
    %v1499 = vadd.s32 %v1431, 2
    %v1500 = vadd.s32 %v1438, 2
    %v1501 = vadd.s32 %v1445, 2
    %v1502 = vadd.s32 %v1452, 2
    %v1503 = vadd.s32 %v1459, 2
    %v1504 = vadd.s32 %v1466, 2
    %v1505 = vadd.s32 %v1473, 2
    %v1506 = vsel %vm1490, %v1498, %v1424
    %v1507 = vsel %vm1491, %v1499, %v1431
    %v1508 = vsel %vm1492, %v1500, %v1438
    %v1509 = vsel %vm1493, %v1501, %v1445
    %v1510 = vsel %vm1494, %v1502, %v1452
    %v1511 = vsel %vm1495, %v1503, %v1459
    %v1512 = vsel %vm1496, %v1504, %v1466
    %v1513 = vsel %vm1497, %v1505, %v1473
    %vm1514 = vcmp.lt.s32.totalorder %v1410, 2
    %vm1515 = vcmp.lt.s32.totalorder %v1411, 2
    %vm1516 = vcmp.lt.s32.totalorder %v1412, 2
    %vm1517 = vcmp.lt.s32.totalorder %v1413, 2
    %vm1518 = vcmp.lt.s32.totalorder %v1414, 2
    %vm1519 = vcmp.lt.s32.totalorder %v1415, 2
    %vm1520 = vcmp.lt.s32.totalorder %v1416, 2
    %vm1521 = vcmp.lt.s32.totalorder %v1417, 2
    %vm1522 = vcmp.lt.s32.totalorder %v1308, 1
    %vm1523 = vcmp.lt.s32.totalorder %v1309, 1
    %vm1524 = vcmp.lt.s32.totalorder %v1310, 1
    %vm1525 = vmand %vm1514, %vm1522
    %vm1526 = vmand %vm1514, %vm1523
    %vm1527 = vmand %vm1514, %vm1524
    %vm1528 = vmand %vm1515, %vm1522
    %vm1529 = vmand %vm1515, %vm1523
    %vm1530 = vmand %vm1515, %vm1524
    %vm1531 = vmand %vm1516, %vm1522
    %vm1532 = vmand %vm1516, %vm1523
    %vm1533 = vmand %vm1516, %vm1524
    %vm1534 = vmand %vm1517, %vm1522
    %vm1535 = vmand %vm1517, %vm1523
    %vm1536 = vmand %vm1517, %vm1524
    %vm1537 = vmand %vm1518, %vm1522
    %vm1538 = vmand %vm1518, %vm1523
    %vm1539 = vmand %vm1518, %vm1524
    %vm1540 = vmand %vm1519, %vm1522
    %vm1541 = vmand %vm1519, %vm1523
    %vm1542 = vmand %vm1519, %vm1524
    %vm1543 = vmand %vm1520, %vm1522
    %vm1544 = vmand %vm1520, %vm1523
    %vm1545 = vmand %vm1520, %vm1524
    %vm1546 = vmand %vm1521, %vm1522
    %vm1547 = vmand %vm1521, %vm1523
    %vm1548 = vmand %vm1521, %vm1524
    %vm1549 = vcmp.ge.s32.totalorder %v1410, 2
    %vm1550 = vcmp.ge.s32.totalorder %v1411, 2
    %vm1551 = vcmp.ge.s32.totalorder %v1412, 2
    %vm1552 = vcmp.ge.s32.totalorder %v1413, 2
    %vm1553 = vcmp.ge.s32.totalorder %v1414, 2
    %vm1554 = vcmp.ge.s32.totalorder %v1415, 2
    %vm1555 = vcmp.ge.s32.totalorder %v1416, 2
    %vm1556 = vcmp.ge.s32.totalorder %v1417, 2
    %vm1557 = vcmp.eq.s32.totalorder %v1308, 17
    %vm1558 = vcmp.eq.s32.totalorder %v1309, 17
    %vm1559 = vcmp.eq.s32.totalorder %v1310, 17
    %vm1560 = vmand %vm1549, %vm1557
    %vm1561 = vmand %vm1549, %vm1558
    %vm1562 = vmand %vm1549, %vm1559
    %vm1563 = vmand %vm1550, %vm1557
    %vm1564 = vmand %vm1550, %vm1558
    %vm1565 = vmand %vm1550, %vm1559
    %vm1566 = vmand %vm1551, %vm1557
    %vm1567 = vmand %vm1551, %vm1558
    %vm1568 = vmand %vm1551, %vm1559
    %vm1569 = vmand %vm1552, %vm1557
    %vm1570 = vmand %vm1552, %vm1558
    %vm1571 = vmand %vm1552, %vm1559
    %vm1572 = vmand %vm1553, %vm1557
    %vm1573 = vmand %vm1553, %vm1558
    %vm1574 = vmand %vm1553, %vm1559
    %vm1575 = vmand %vm1554, %vm1557
    %vm1576 = vmand %vm1554, %vm1558
    %vm1577 = vmand %vm1554, %vm1559
    %vm1578 = vmand %vm1555, %vm1557
    %vm1579 = vmand %vm1555, %vm1558
    %vm1580 = vmand %vm1555, %vm1559
    %vm1581 = vmand %vm1556, %vm1557
    %vm1582 = vmand %vm1556, %vm1558
    %vm1583 = vmand %vm1556, %vm1559
    %vm1584 = vmor %vm1525, %vm1560
    %vm1585 = vmor %vm1526, %vm1561
    %vm1586 = vmor %vm1527, %vm1562
    %vm1587 = vmor %vm1528, %vm1563
    %vm1588 = vmor %vm1529, %vm1564
    %vm1589 = vmor %vm1530, %vm1565
    %vm1590 = vmor %vm1531, %vm1566
    %vm1591 = vmor %vm1532, %vm1567
    %vm1592 = vmor %vm1533, %vm1568
    %vm1593 = vmor %vm1534, %vm1569
    %vm1594 = vmor %vm1535, %vm1570
    %vm1595 = vmor %vm1536, %vm1571
    %vm1596 = vmor %vm1537, %vm1572
    %vm1597 = vmor %vm1538, %vm1573
    %vm1598 = vmor %vm1539, %vm1574
    %vm1599 = vmor %vm1540, %vm1575
    %vm1600 = vmor %vm1541, %vm1576
    %vm1601 = vmor %vm1542, %vm1577
    %vm1602 = vmor %vm1543, %vm1578
    %vm1603 = vmor %vm1544, %vm1579
    %vm1604 = vmor %vm1545, %vm1580
    %vm1605 = vmor %vm1546, %vm1581
    %vm1606 = vmor %vm1547, %vm1582
    %vm1607 = vmor %vm1548, %vm1583
    %vm1608 = vcmp.eq.s32.totalorder %v1506, 0
    %vm1609 = vcmp.eq.s32.totalorder %v1507, 0
    %vm1610 = vcmp.eq.s32.totalorder %v1508, 0
    %vm1611 = vcmp.eq.s32.totalorder %v1509, 0
    %vm1612 = vcmp.eq.s32.totalorder %v1510, 0
    %vm1613 = vcmp.eq.s32.totalorder %v1511, 0
    %vm1614 = vcmp.eq.s32.totalorder %v1512, 0
    %vm1615 = vcmp.eq.s32.totalorder %v1513, 0
    %vm1616 = vcmp.lt.s32.totalorder %v1312, 1
    %vm1617 = vmand %vm1608, %vm1616
    %vm1618 = vmand %vm1609, %vm1616
    %vm1619 = vmand %vm1610, %vm1616
    %vm1620 = vmand %vm1611, %vm1616
    %vm1621 = vmand %vm1612, %vm1616
    %vm1622 = vmand %vm1613, %vm1616
    %vm1623 = vmand %vm1614, %vm1616
    %vm1624 = vmand %vm1615, %vm1616
    %vm1625 = vmor %vm1584, %vm1617
    %vm1626 = vmor %vm1585, %vm1617
    %vm1627 = vmor %vm1586, %vm1617
    %vm1628 = vmor %vm1587, %vm1618
    %vm1629 = vmor %vm1588, %vm1618
    %vm1630 = vmor %vm1589, %vm1618
    %vm1631 = vmor %vm1590, %vm1619
    %vm1632 = vmor %vm1591, %vm1619
    %vm1633 = vmor %vm1592, %vm1619
    %vm1634 = vmor %vm1593, %vm1620
    %vm1635 = vmor %vm1594, %vm1620
    %vm1636 = vmor %vm1595, %vm1620
    %vm1637 = vmor %vm1596, %vm1621
    %vm1638 = vmor %vm1597, %vm1621
    %vm1639 = vmor %vm1598, %vm1621
    %vm1640 = vmor %vm1599, %vm1622
    %vm1641 = vmor %vm1600, %vm1622
    %vm1642 = vmor %vm1601, %vm1622
    %vm1643 = vmor %vm1602, %vm1623
    %vm1644 = vmor %vm1603, %vm1623
    %vm1645 = vmor %vm1604, %vm1623
    %vm1646 = vmor %vm1605, %vm1624
    %vm1647 = vmor %vm1606, %vm1624
    %vm1648 = vmor %vm1607, %vm1624
    %vm1649 = vcmp.eq.s32.totalorder %v1506, 1
    %vm1650 = vcmp.eq.s32.totalorder %v1507, 1
    %vm1651 = vcmp.eq.s32.totalorder %v1508, 1
    %vm1652 = vcmp.eq.s32.totalorder %v1509, 1
    %vm1653 = vcmp.eq.s32.totalorder %v1510, 1
    %vm1654 = vcmp.eq.s32.totalorder %v1511, 1
    %vm1655 = vcmp.eq.s32.totalorder %v1512, 1
    %vm1656 = vcmp.eq.s32.totalorder %v1513, 1
    %vm1657 = vcmp.ge.s32.totalorder %v1312, 17
    %vm1658 = vmand %vm1649, %vm1657
    %vm1659 = vmand %vm1650, %vm1657
    %vm1660 = vmand %vm1651, %vm1657
    %vm1661 = vmand %vm1652, %vm1657
    %vm1662 = vmand %vm1653, %vm1657
    %vm1663 = vmand %vm1654, %vm1657
    %vm1664 = vmand %vm1655, %vm1657
    %vm1665 = vmand %vm1656, %vm1657
    %vm1666 = vmor %vm1625, %vm1658
    %vm1667 = vmor %vm1626, %vm1658
    %vm1668 = vmor %vm1627, %vm1658
    %vm1669 = vmor %vm1628, %vm1659
    %vm1670 = vmor %vm1629, %vm1659
    %vm1671 = vmor %vm1630, %vm1659
    %vm1672 = vmor %vm1631, %vm1660
    %vm1673 = vmor %vm1632, %vm1660
    %vm1674 = vmor %vm1633, %vm1660
    %vm1675 = vmor %vm1634, %vm1661
    %vm1676 = vmor %vm1635, %vm1661
    %vm1677 = vmor %vm1636, %vm1661
    %vm1678 = vmor %vm1637, %vm1662
    %vm1679 = vmor %vm1638, %vm1662
    %vm1680 = vmor %vm1639, %vm1662
    %vm1681 = vmor %vm1640, %vm1663
    %vm1682 = vmor %vm1641, %vm1663
    %vm1683 = vmor %vm1642, %vm1663
    %vm1684 = vmor %vm1643, %vm1664
    %vm1685 = vmor %vm1644, %vm1664
    %vm1686 = vmor %vm1645, %vm1664
    %vm1687 = vmor %vm1646, %vm1665
    %vm1688 = vmor %vm1647, %vm1665
    %vm1689 = vmor %vm1648, %vm1665
    %v1690 = vsel %vm1666, 1, 0
    %v1691 = vsel %vm1667, 1, 0
    %v1692 = vsel %vm1668, 1, 0
    %v1693 = vsel %vm1669, 1, 0
    %v1694 = vsel %vm1670, 1, 0
    %v1695 = vsel %vm1671, 1, 0
    %v1696 = vsel %vm1672, 1, 0
    %v1697 = vsel %vm1673, 1, 0
    %v1698 = vsel %vm1674, 1, 0
    %v1699 = vsel %vm1675, 1, 0
    %v1700 = vsel %vm1676, 1, 0
    %v1701 = vsel %vm1677, 1, 0
    %v1702 = vsel %vm1678, 1, 0
    %v1703 = vsel %vm1679, 1, 0
    %v1704 = vsel %vm1680, 1, 0
    %v1705 = vsel %vm1681, 1, 0
    %v1706 = vsel %vm1682, 1, 0
    %v1707 = vsel %vm1683, 1, 0
    %v1708 = vsel %vm1684, 1, 0
    %v1709 = vsel %vm1685, 1, 0
    %v1710 = vsel %vm1686, 1, 0
    %v1711 = vsel %vm1687, 1, 0
    %v1712 = vsel %vm1688, 1, 0
    %v1713 = vsel %vm1689, 1, 0
    %vm1714 = vcmp.eq.s32.totalorder %v1690, 1
    %vm1715 = vcmp.eq.s32.totalorder %v1691, 1
    %vm1716 = vcmp.eq.s32.totalorder %v1692, 1
    %vm1717 = vcmp.eq.s32.totalorder %v1693, 1
    %vm1718 = vcmp.eq.s32.totalorder %v1694, 1
    %vm1719 = vcmp.eq.s32.totalorder %v1695, 1
    %vm1720 = vcmp.eq.s32.totalorder %v1696, 1
    %vm1721 = vcmp.eq.s32.totalorder %v1697, 1
    %vm1722 = vcmp.eq.s32.totalorder %v1698, 1
    %vm1723 = vcmp.eq.s32.totalorder %v1699, 1
    %vm1724 = vcmp.eq.s32.totalorder %v1700, 1
    %vm1725 = vcmp.eq.s32.totalorder %v1701, 1
    %vm1726 = vcmp.eq.s32.totalorder %v1702, 1
    %vm1727 = vcmp.eq.s32.totalorder %v1703, 1
    %vm1728 = vcmp.eq.s32.totalorder %v1704, 1
    %vm1729 = vcmp.eq.s32.totalorder %v1705, 1
    %vm1730 = vcmp.eq.s32.totalorder %v1706, 1
    %vm1731 = vcmp.eq.s32.totalorder %v1707, 1
    %vm1732 = vcmp.eq.s32.totalorder %v1708, 1
    %vm1733 = vcmp.eq.s32.totalorder %v1709, 1
    %vm1734 = vcmp.eq.s32.totalorder %v1710, 1
    %vm1735 = vcmp.eq.s32.totalorder %v1711, 1
    %vm1736 = vcmp.eq.s32.totalorder %v1712, 1
    %vm1737 = vcmp.eq.s32.totalorder %v1713, 1
    %v1738 = vsel %vm1714, 0.0, %v1211
    %v1739 = vsel %vm1715, 0.0, %v1212
    %v1740 = vsel %vm1716, 0.0, %v1213
    %v1741 = vsel %vm1714, 0.0, %v1214
    %v1742 = vsel %vm1715, 0.0, %v1215
    %v1743 = vsel %vm1716, 0.0, %v1216
    %v1744 = vsel %vm1714, 0.0, %v1217
    %v1745 = vsel %vm1715, 0.0, %v1218
    %v1746 = vsel %vm1716, 0.0, %v1219
    %v1747 = vsel %vm1714, 0.0, %v1220
    %v1748 = vsel %vm1715, 0.0, %v1221
    %v1749 = vsel %vm1716, 0.0, %v1222
    %v1750 = vsel %vm1717, 0.0, %v1223
    %v1751 = vsel %vm1718, 0.0, %v1224
    %v1752 = vsel %vm1719, 0.0, %v1225
    %v1753 = vsel %vm1717, 0.0, %v1226
    %v1754 = vsel %vm1718, 0.0, %v1227
    %v1755 = vsel %vm1719, 0.0, %v1228
    %v1756 = vsel %vm1717, 0.0, %v1229
    %v1757 = vsel %vm1718, 0.0, %v1230
    %v1758 = vsel %vm1719, 0.0, %v1231
    %v1759 = vsel %vm1717, 0.0, %v1232
    %v1760 = vsel %vm1718, 0.0, %v1233
    %v1761 = vsel %vm1719, 0.0, %v1234
    %v1762 = vsel %vm1720, 0.0, %v1235
    %v1763 = vsel %vm1721, 0.0, %v1236
    %v1764 = vsel %vm1722, 0.0, %v1237
    %v1765 = vsel %vm1720, 0.0, %v1238
    %v1766 = vsel %vm1721, 0.0, %v1239
    %v1767 = vsel %vm1722, 0.0, %v1240
    %v1768 = vsel %vm1720, 0.0, %v1241
    %v1769 = vsel %vm1721, 0.0, %v1242
    %v1770 = vsel %vm1722, 0.0, %v1243
    %v1771 = vsel %vm1720, 0.0, %v1244
    %v1772 = vsel %vm1721, 0.0, %v1245
    %v1773 = vsel %vm1722, 0.0, %v1246
    %v1774 = vsel %vm1723, 0.0, %v1247
    %v1775 = vsel %vm1724, 0.0, %v1248
    %v1776 = vsel %vm1725, 0.0, %v1249
    %v1777 = vsel %vm1723, 0.0, %v1250
    %v1778 = vsel %vm1724, 0.0, %v1251
    %v1779 = vsel %vm1725, 0.0, %v1252
    %v1780 = vsel %vm1723, 0.0, %v1253
    %v1781 = vsel %vm1724, 0.0, %v1254
    %v1782 = vsel %vm1725, 0.0, %v1255
    %v1783 = vsel %vm1723, 0.0, %v1256
    %v1784 = vsel %vm1724, 0.0, %v1257
    %v1785 = vsel %vm1725, 0.0, %v1258
    %v1786 = vsel %vm1726, 0.0, %v1259
    %v1787 = vsel %vm1727, 0.0, %v1260
    %v1788 = vsel %vm1728, 0.0, %v1261
    %v1789 = vsel %vm1726, 0.0, %v1262
    %v1790 = vsel %vm1727, 0.0, %v1263
    %v1791 = vsel %vm1728, 0.0, %v1264
    %v1792 = vsel %vm1726, 0.0, %v1265
    %v1793 = vsel %vm1727, 0.0, %v1266
    %v1794 = vsel %vm1728, 0.0, %v1267
    %v1795 = vsel %vm1726, 0.0, %v1268
    %v1796 = vsel %vm1727, 0.0, %v1269
    %v1797 = vsel %vm1728, 0.0, %v1270
    %v1798 = vsel %vm1729, 0.0, %v1271
    %v1799 = vsel %vm1730, 0.0, %v1272
    %v1800 = vsel %vm1731, 0.0, %v1273
    %v1801 = vsel %vm1729, 0.0, %v1274
    %v1802 = vsel %vm1730, 0.0, %v1275
    %v1803 = vsel %vm1731, 0.0, %v1276
    %v1804 = vsel %vm1729, 0.0, %v1277
    %v1805 = vsel %vm1730, 0.0, %v1278
    %v1806 = vsel %vm1731, 0.0, %v1279
    %v1807 = vsel %vm1729, 0.0, %v1280
    %v1808 = vsel %vm1730, 0.0, %v1281
    %v1809 = vsel %vm1731, 0.0, %v1282
    %v1810 = vsel %vm1732, 0.0, %v1283
    %v1811 = vsel %vm1733, 0.0, %v1284
    %v1812 = vsel %vm1734, 0.0, %v1285
    %v1813 = vsel %vm1732, 0.0, %v1286
    %v1814 = vsel %vm1733, 0.0, %v1287
    %v1815 = vsel %vm1734, 0.0, %v1288
    %v1816 = vsel %vm1732, 0.0, %v1289
    %v1817 = vsel %vm1733, 0.0, %v1290
    %v1818 = vsel %vm1734, 0.0, %v1291
    %v1819 = vsel %vm1732, 0.0, %v1292
    %v1820 = vsel %vm1733, 0.0, %v1293
    %v1821 = vsel %vm1734, 0.0, %v1294
    %v1822 = vsel %vm1735, 0.0, %v1295
    %v1823 = vsel %vm1736, 0.0, %v1296
    %v1824 = vsel %vm1737, 0.0, %v1297
    %v1825 = vsel %vm1735, 0.0, %v1298
    %v1826 = vsel %vm1736, 0.0, %v1299
    %v1827 = vsel %vm1737, 0.0, %v1300
    %v1828 = vsel %vm1735, 0.0, %v1301
    %v1829 = vsel %vm1736, 0.0, %v1302
    %v1830 = vsel %vm1737, 0.0, %v1303
    %v1831 = vsel %vm1735, 0.0, %v1304
    %v1832 = vsel %vm1736, 0.0, %v1305
    %v1833 = vsel %vm1737, 0.0, %v1306
    %vm1834 = vcmask 146432
    %1835 = vst.msk [vmem:[%s1] sm:$0xff] %vm1834, %v1738
    %1836 = vst.msk [vmem:[%s1 + $0x8] sm:$0xff] %vm1834, %v1739
    %vm1837 = vcmask 140288
    %1838 = vst.msk [vmem:[%s1 + $0x10] sm:$0x3] %vm1837, %v1740
    %1839 = vst.msk [vmem:[%s1 + $0x18] sm:$0xff] %vm1834, %v1741
    %1840 = vst.msk [vmem:[%s1 + $0x20] sm:$0xff] %vm1834, %v1742
    %1841 = vst.msk [vmem:[%s1 + $0x28] sm:$0x3] %vm1837, %v1743
    %1842 = vst.msk [vmem:[%s1 + $0x30] sm:$0xff] %vm1834, %v1744
    %1843 = vst.msk [vmem:[%s1 + $0x38] sm:$0xff] %vm1834, %v1745
    %1844 = vst.msk [vmem:[%s1 + $0x40] sm:$0x3] %vm1837, %v1746
    %1845 = vst.msk [vmem:[%s1 + $0x48] sm:$0xff] %vm1834, %v1747
    %1846 = vst.msk [vmem:[%s1 + $0x50] sm:$0xff] %vm1834, %v1748
    %1847 = vst.msk [vmem:[%s1 + $0x58] sm:$0x3] %vm1837, %v1749
    %1848 = vst.msk [vmem:[%s1 + $0x60] sm:$0xff] %vm1834, %v1750
    %1849 = vst.msk [vmem:[%s1 + $0x68] sm:$0xff] %vm1834, %v1751
    %1850 = vst.msk [vmem:[%s1 + $0x70] sm:$0x3] %vm1837, %v1752
    %1851 = vst.msk [vmem:[%s1 + $0x78] sm:$0xff] %vm1834, %v1753
    %1852 = vst.msk [vmem:[%s1 + $0x80] sm:$0xff] %vm1834, %v1754
    %1853 = vst.msk [vmem:[%s1 + $0x88] sm:$0x3] %vm1837, %v1755
    %1854 = vst.msk [vmem:[%s1 + $0x90] sm:$0xff] %vm1834, %v1756
    %1855 = vst.msk [vmem:[%s1 + $0x98] sm:$0xff] %vm1834, %v1757
    %1856 = vst.msk [vmem:[%s1 + $0xa0] sm:$0x3] %vm1837, %v1758
    %1857 = vst.msk [vmem:[%s1 + $0xa8] sm:$0xff] %vm1834, %v1759
    %1858 = vst.msk [vmem:[%s1 + $0xb0] sm:$0xff] %vm1834, %v1760
    %1859 = vst.msk [vmem:[%s1 + $0xb8] sm:$0x3] %vm1837, %v1761
    %1860 = vst.msk [vmem:[%s1 + $0xc0] sm:$0xff] %vm1834, %v1762
    %1861 = vst.msk [vmem:[%s1 + $0xc8] sm:$0xff] %vm1834, %v1763
    %1862 = vst.msk [vmem:[%s1 + $0xd0] sm:$0x3] %vm1837, %v1764
    %1863 = vst.msk [vmem:[%s1 + $0xd8] sm:$0xff] %vm1834, %v1765
    %1864 = vst.msk [vmem:[%s1 + $0xe0] sm:$0xff] %vm1834, %v1766
    %1865 = vst.msk [vmem:[%s1 + $0xe8] sm:$0x3] %vm1837, %v1767
    %1866 = vst.msk [vmem:[%s1 + $0xf0] sm:$0xff] %vm1834, %v1768
    %1867 = vst.msk [vmem:[%s1 + $0xf8] sm:$0xff] %vm1834, %v1769
    %1868 = vst.msk [vmem:[%s1 + $0x100] sm:$0x3] %vm1837, %v1770
    %1869 = vst.msk [vmem:[%s1 + $0x108] sm:$0xff] %vm1834, %v1771
    %1870 = vst.msk [vmem:[%s1 + $0x110] sm:$0xff] %vm1834, %v1772
    %1871 = vst.msk [vmem:[%s1 + $0x118] sm:$0x3] %vm1837, %v1773
    %1872 = vst.msk [vmem:[%s1 + $0x120] sm:$0xff] %vm1834, %v1774
    %1873 = vst.msk [vmem:[%s1 + $0x128] sm:$0xff] %vm1834, %v1775
    %1874 = vst.msk [vmem:[%s1 + $0x130] sm:$0x3] %vm1837, %v1776
    %1875 = vst.msk [vmem:[%s1 + $0x138] sm:$0xff] %vm1834, %v1777
    %1876 = vst.msk [vmem:[%s1 + $0x140] sm:$0xff] %vm1834, %v1778
    %1877 = vst.msk [vmem:[%s1 + $0x148] sm:$0x3] %vm1837, %v1779
    %1878 = vst.msk [vmem:[%s1 + $0x150] sm:$0xff] %vm1834, %v1780
    %1879 = vst.msk [vmem:[%s1 + $0x158] sm:$0xff] %vm1834, %v1781
    %1880 = vst.msk [vmem:[%s1 + $0x160] sm:$0x3] %vm1837, %v1782
    %1881 = vst.msk [vmem:[%s1 + $0x168] sm:$0xff] %vm1834, %v1783
    %1882 = vst.msk [vmem:[%s1 + $0x170] sm:$0xff] %vm1834, %v1784
    %1883 = vst.msk [vmem:[%s1 + $0x178] sm:$0x3] %vm1837, %v1785
    %1884 = vst.msk [vmem:[%s1 + $0x180] sm:$0xff] %vm1834, %v1786
    %1885 = vst.msk [vmem:[%s1 + $0x188] sm:$0xff] %vm1834, %v1787
    %1886 = vst.msk [vmem:[%s1 + $0x190] sm:$0x3] %vm1837, %v1788
    %1887 = vst.msk [vmem:[%s1 + $0x198] sm:$0xff] %vm1834, %v1789
    %1888 = vst.msk [vmem:[%s1 + $0x1a0] sm:$0xff] %vm1834, %v1790
    %1889 = vst.msk [vmem:[%s1 + $0x1a8] sm:$0x3] %vm1837, %v1791
    %1890 = vst.msk [vmem:[%s1 + $0x1b0] sm:$0xff] %vm1834, %v1792
    %1891 = vst.msk [vmem:[%s1 + $0x1b8] sm:$0xff] %vm1834, %v1793
    %1892 = vst.msk [vmem:[%s1 + $0x1c0] sm:$0x3] %vm1837, %v1794
    %1893 = vst.msk [vmem:[%s1 + $0x1c8] sm:$0xff] %vm1834, %v1795
    %1894 = vst.msk [vmem:[%s1 + $0x1d0] sm:$0xff] %vm1834, %v1796
    %1895 = vst.msk [vmem:[%s1 + $0x1d8] sm:$0x3] %vm1837, %v1797
    %1896 = vst.msk [vmem:[%s1 + $0x1e0] sm:$0xff] %vm1834, %v1798
    %1897 = vst.msk [vmem:[%s1 + $0x1e8] sm:$0xff] %vm1834, %v1799
    %1898 = vst.msk [vmem:[%s1 + $0x1f0] sm:$0x3] %vm1837, %v1800
    %1899 = vst.msk [vmem:[%s1 + $0x1f8] sm:$0xff] %vm1834, %v1801
    %1900 = vst.msk [vmem:[%s1 + $0x200] sm:$0xff] %vm1834, %v1802
    %1901 = vst.msk [vmem:[%s1 + $0x208] sm:$0x3] %vm1837, %v1803
    %1902 = vst.msk [vmem:[%s1 + $0x210] sm:$0xff] %vm1834, %v1804
    %1903 = vst.msk [vmem:[%s1 + $0x218] sm:$0xff] %vm1834, %v1805
    %1904 = vst.msk [vmem:[%s1 + $0x220] sm:$0x3] %vm1837, %v1806
    %1905 = vst.msk [vmem:[%s1 + $0x228] sm:$0xff] %vm1834, %v1807
    %1906 = vst.msk [vmem:[%s1 + $0x230] sm:$0xff] %vm1834, %v1808
    %1907 = vst.msk [vmem:[%s1 + $0x238] sm:$0x3] %vm1837, %v1809
    %1908 = vst.msk [vmem:[%s1 + $0x240] sm:$0xff] %vm1834, %v1810
    %1909 = vst.msk [vmem:[%s1 + $0x248] sm:$0xff] %vm1834, %v1811
    %1910 = vst.msk [vmem:[%s1 + $0x250] sm:$0x3] %vm1837, %v1812
    %1911 = vst.msk [vmem:[%s1 + $0x258] sm:$0xff] %vm1834, %v1813
    %1912 = vst.msk [vmem:[%s1 + $0x260] sm:$0xff] %vm1834, %v1814
    %1913 = vst.msk [vmem:[%s1 + $0x268] sm:$0x3] %vm1837, %v1815
    %1914 = vst.msk [vmem:[%s1 + $0x270] sm:$0xff] %vm1834, %v1816
    %1915 = vst.msk [vmem:[%s1 + $0x278] sm:$0xff] %vm1834, %v1817
    %1916 = vst.msk [vmem:[%s1 + $0x280] sm:$0x3] %vm1837, %v1818
    %1917 = vst.msk [vmem:[%s1 + $0x288] sm:$0xff] %vm1834, %v1819
    %1918 = vst.msk [vmem:[%s1 + $0x290] sm:$0xff] %vm1834, %v1820
    %1919 = vst.msk [vmem:[%s1 + $0x298] sm:$0x3] %vm1837, %v1821
    %1920 = vst.msk [vmem:[%s1 + $0x2a0] sm:$0xff] %vm1834, %v1822
    %1921 = vst.msk [vmem:[%s1 + $0x2a8] sm:$0xff] %vm1834, %v1823
    %1922 = vst.msk [vmem:[%s1 + $0x2b0] sm:$0x3] %vm1837, %v1824
    %1923 = vst.msk [vmem:[%s1 + $0x2b8] sm:$0xff] %vm1834, %v1825
    %1924 = vst.msk [vmem:[%s1 + $0x2c0] sm:$0xff] %vm1834, %v1826
    %1925 = vst.msk [vmem:[%s1 + $0x2c8] sm:$0x3] %vm1837, %v1827
    %1926 = vst.msk [vmem:[%s1 + $0x2d0] sm:$0xff] %vm1834, %v1828
    %1927 = vst.msk [vmem:[%s1 + $0x2d8] sm:$0xff] %vm1834, %v1829
    %1928 = vst.msk [vmem:[%s1 + $0x2e0] sm:$0x3] %vm1837, %v1830
    %1929 = vst.msk [vmem:[%s1 + $0x2e8] sm:$0xff] %vm1834, %v1831
    %1930 = vst.msk [vmem:[%s1 + $0x2f0] sm:$0xff] %vm1834, %v1832
    %1931 = vst.msk [vmem:[%s1 + $0x2f8] sm:$0x3] %vm1837, %v1833
    // Predicated region
    $region10: #{tpu_custom_call.1} parent=1 // pred_check
      _
    $region11: #{tpu_custom_call.1} parent=1 // pred_check_branch
      %1933 = sbr.rel (0) target = $region13
    $region12: #{tpu_custom_call.1} parent=1 // pred_region
      _
    $region13: #{tpu_custom_call.1} parent=1 // pred_fallthru
      _
    // Predicated region
    $region14: #{tpu_custom_call.1} parent=1 // pred_check
      _
    $region15: #{tpu_custom_call.1} parent=1 // pred_check_branch
      %1935 = sbr.rel (0) target = $region17
    $region16: #{tpu_custom_call.1} parent=1 // pred_region
      _
    $region17: #{tpu_custom_call.1} parent=1 // pred_fallthru
      _
    %1936 = vsyncpa [#allocation3], 1

</llo_original>
